<compile_context>
chip_gen: v6e
topology: v6e:2x2x1
jax: 0.10.0
libtpu: 0.0.40
codegen_flags: <defaults>
</compile_context>

<pallas_src>
import functools

import jax
import jax.numpy as jnp
from jax.experimental import pallas as pl
from jax.experimental.pallas import tpu as pltpu


def _patch_mlp_kernel(x_ref, w1_ref, b1_ref, w2_ref, b2_ref, o_ref, *,
                      n_patches, patch_len, in_channel):
    """One grid step: (TB, C, L) slab of the selected trace -> (TB, n, d_model).

    x_ref:  (TB, C, L)               f32  - trace already selected by index_map
    w1_ref: (C, patch_len, d_model)  f32  - resident, rows regrouped per channel
    b1_ref: (1, d_model)             f32  - resident
    w2_ref: (d_model, d_model)       bf16 - resident
    b2_ref: (1, d_model)             f32  - resident
    o_ref:  (TB, n_patches, d_model) out dtype
    """
    b1 = b1_ref[...]
    b2 = b2_ref[...]
    w2 = w2_ref[...]
    # TODO(synk): for very large n_patches switch this static unroll to a
    # fori_loop with a lane-aligned dynamic slice to keep compile time bounded.
    for p in range(n_patches):
        lo = p * patch_len
        # layer 1: K = patch_len per channel, kept in f32 (tiny FLOPs, exact).
        h = jnp.dot(x_ref[:, 0, lo:lo + patch_len].astype(jnp.float32), w1_ref[0],
                    preferred_element_type=jnp.float32)
        for c in range(1, in_channel):
            h = h + jnp.dot(x_ref[:, c, lo:lo + patch_len].astype(jnp.float32),
                            w1_ref[c], preferred_element_type=jnp.float32)
        h = jnp.maximum(h + b1, 0.0)                 # bias + ReLU, f32 on the VPU
        # layer 2: bf16 operands, f32 accumulation on the MXU.
        out = jnp.dot(h.astype(w2.dtype), w2, preferred_element_type=jnp.float32)
        o_ref[:, p, :] = (out + b2).astype(o_ref.dtype)


def _choose_lead_tile(lead_sz, n_patches, target_patch_rows):
    """Rows of the lead axis per grid step (each row carries n_patches patches)."""
    tb = max(1, target_patch_rows // max(n_patches, 1))
    if lead_sz >= 16:
        # keep >= 2 grid steps: lets the DMA pipeline overlap with compute and
        # lets v7x's two TensorCores both get work via the "parallel" axis.
        tb = min(tb, -(-lead_sz // 2))
    tb = min(tb, lead_sz)
    if 8 <= tb < lead_sz:
        tb = (tb // 8) * 8
    return max(tb, 1)


def linear_patch_encoder2(x, params, *, trace_id=0, patch_len=16,
                          target_patch_rows=4096, out_dtype=jnp.float32):
    """x: (B, n_traces, C, L) or (B, d1, n_traces, C, L) float32.
    params = (w1 (patch_dim, d_model), b1 (d_model,), w2 (d_model, d_model), b2 (d_model,)).
    Returns (..., n_patches, d_model) in out_dtype."""
    w1, b1, w2, b2 = params
    patch_dim, d_model = w1.shape
    in_channel = patch_dim // patch_len
    assert patch_dim == patch_len * in_channel

    if x.ndim == 5:
        b0, d1, n_traces, C, L = x.shape
        x4 = x.reshape(b0 * d1, n_traces, C, L)   # contiguous -> free metadata reshape
        lead_shape = (b0, d1)
    else:
        assert x.ndim == 4
        b0, n_traces, C, L = x.shape
        x4 = x
        lead_shape = (b0,)
    assert C == in_channel, (C, in_channel)
    assert 0 <= trace_id < n_traces
    assert L % patch_len == 0
    n_patches = L // patch_len
    lead_sz = x4.shape[0]

    # Tiny resident operands (only these touch XLA; the big input/output streams
    # flow exclusively through the pallas_call).  w1 rows are in '(l c)' order;
    # regroup per channel so the per-channel slab matmul in the kernel reproduces
    # the Rearrange without any transpose of x.
    w1_stack = jnp.transpose(
        w1.astype(jnp.float32).reshape(patch_len, in_channel, d_model), (1, 0, 2))
    b1_f = b1.reshape(1, d_model).astype(jnp.float32)
    w2_bf = w2.astype(jnp.bfloat16)
    b2_f = b2.reshape(1, d_model).astype(jnp.float32)

    tb = _choose_lead_tile(lead_sz, n_patches, target_patch_rows)
    grid = (pl.cdiv(lead_sz, tb),)

    kernel = functools.partial(_patch_mlp_kernel, n_patches=n_patches,
                               patch_len=patch_len, in_channel=in_channel)

    out = pl.pallas_call(
        kernel,
        out_shape=jax.ShapeDtypeStruct((lead_sz, n_patches, d_model), out_dtype),
        grid_spec=pltpu.PrefetchScalarGridSpec(
            num_scalar_prefetch=0,
            grid=grid,
            in_specs=[
                # Streamed input: trace_id is selected in the index_map, so only
                # the selected trace is ever read from HBM; last (ragged) lead
                # block is handled by the grid, no padding copies.
                # TODO(synk): on v7x, if xprof shows exposed input DMA, add
                # pipeline_mode=pl.Buffered(3) to this spec.
                pl.BlockSpec((tb, None, C, L),
                             lambda i, t=trace_id: (i, t, 0, 0)),
                pl.BlockSpec((in_channel, patch_len, d_model), lambda i: (0, 0, 0)),
                pl.BlockSpec((1, d_model), lambda i: (0, 0)),
                pl.BlockSpec((d_model, d_model), lambda i: (0, 0)),
                pl.BlockSpec((1, d_model), lambda i: (0, 0)),
            ],
            out_specs=pl.BlockSpec((tb, n_patches, d_model), lambda i: (i, 0, 0)),
        ),
        compiler_params=pltpu.CompilerParams(
            dimension_semantics=("parallel",),
        ),
    )(x4, w1_stack, b1_f, w2_bf, b2_f)

    return out.reshape(*lead_shape, n_patches, d_model)


def _reference(x, params, *, trace_id=0, patch_len=16):
    w1, b1, w2, b2 = params
    trace = x[:, :, trace_id] if x.ndim == 5 else x[:, trace_id]
    *lead, C, L = trace.shape
    n = L // patch_len
    p = trace.reshape(*lead, C, n, patch_len)
    p = jnp.moveaxis(p, -3, -1)                    # (..., n, l, C)
    p = p.reshape(*lead, n, patch_len * C)         # feature order '(l c)'
    h = jnp.maximum(p @ w1 + b1, 0.0)
    return h @ w2 + b2


def init_params(key, patch_dim, d_model):
    k1, k2, k3, k4 = jax.random.split(key, 4)
    w1 = jax.random.normal(k1, (patch_dim, d_model), jnp.float32) * 0.05
    b1 = jax.random.normal(k2, (d_model,), jnp.float32) * 0.05
    w2 = jax.random.normal(k3, (d_model, d_model), jnp.float32) * 0.05
    b2 = jax.random.normal(k4, (d_model,), jnp.float32) * 0.05
    return w1, b1, w2, b2


if __name__ == "__main__":
    d_model = 128
    key = jax.random.PRNGKey(0)
    ks = jax.random.split(key, 6)

    def check(x, patch_len, in_channel, trace_id, kp):
        params = init_params(kp, patch_len * in_channel, d_model)
        out = jax.block_until_ready(
            linear_patch_encoder2(x, params, trace_id=trace_id, patch_len=patch_len))
        ref = _reference(x, params, trace_id=trace_id, patch_len=patch_len)
        assert out.shape == ref.shape, (out.shape, ref.shape)
        err = float(jnp.max(jnp.abs(out - ref)))
        assert jnp.allclose(out, ref, atol=1e-2, rtol=1e-2), f"max abs err {err}"

    # 1) module defaults: trace_id=0, patch_len=16, in_channel=1, d_model=128
    x = jax.random.normal(ks[0], (2, 3, 1, 128), jnp.float32)
    check(x, 16, 1, 0, ks[1])

    # 2) larger batch -> multi-step "parallel" grid (exercises the pipeline)
    x = jax.random.normal(ks[2], (64, 2, 1, 128), jnp.float32)
    check(x, 16, 1, 1, ks[3])

    # 3) 5-D input and in_channel > 1 (per-channel w1 path in-kernel)
    x = jax.random.normal(ks[4], (2, 3, 2, 2, 64), jnp.float32)
    check(x, 16, 2, 1, ks[5])

    print("KERNEL_OK")
</pallas_src>

<mosaic_0001>
module attributes {stable_mosaic.version = 11 : i64} {
  func.func @_patch_mlp_kernel(%arg0: i32, %arg1: memref<2x1x1x128xf32, #tpu.memory_space<vmem>>, %arg2: memref<1x16x128xf32, #tpu.memory_space<vmem>>, %arg3: memref<1x128xf32, #tpu.memory_space<vmem>>, %arg4: memref<128x128xbf16, #tpu.memory_space<vmem>>, %arg5: memref<1x128xf32, #tpu.memory_space<vmem>>, %arg6: memref<2x8x128xf32, #tpu.memory_space<vmem>>) attributes {dimension_semantics = [#tpu.dimension_semantics<parallel>], iteration_bounds = array<i64: 1>, scalar_prefetch = 0 : i64, scratch_operands = 0 : i64, tpu.core_type = #tpu.core_type<tc>, window_params = [{transform_indices = @transform_0, window_bounds = array<i64: 2, 1, 1, 128>}, {pipeline_mode = #tpu.pipeline_mode<synchronous>, transform_indices = @transform_1, window_bounds = array<i64: 1, 16, 128>}, {pipeline_mode = #tpu.pipeline_mode<synchronous>, transform_indices = @transform_2, window_bounds = array<i64: 1, 128>}, {pipeline_mode = #tpu.pipeline_mode<synchronous>, transform_indices = @transform_3, window_bounds = array<i64: 128, 128>}, {pipeline_mode = #tpu.pipeline_mode<synchronous>, transform_indices = @transform_4, window_bounds = array<i64: 1, 128>}, {transform_indices = @transform_5, window_bounds = array<i64: 2, 8, 128>}]} {
    %c0 = arith.constant 0 : index
    %c0_0 = arith.constant 0 : index
    %0 = vector.load %arg3[%c0, %c0_0] : memref<1x128xf32, #tpu.memory_space<vmem>>, vector<1x128xf32>
    %c0_1 = arith.constant 0 : index
    %c0_2 = arith.constant 0 : index
    %1 = vector.load %arg5[%c0_1, %c0_2] : memref<1x128xf32, #tpu.memory_space<vmem>>, vector<1x128xf32>
    %c0_3 = arith.constant 0 : index
    %c0_4 = arith.constant 0 : index
    %2 = vector.load %arg4[%c0_3, %c0_4] : memref<128x128xbf16, #tpu.memory_space<vmem>>, vector<128x128xbf16>
    %c0_5 = arith.constant 0 : index
    %c0_6 = arith.constant 0 : index
    %c0_7 = arith.constant 0 : index
    %c0_8 = arith.constant 0 : index
    %3 = vector.load %arg1[%c0_5, %c0_6, %c0_7, %c0_8] : memref<2x1x1x128xf32, #tpu.memory_space<vmem>>, vector<2x1x1x16xf32>
    %4 = vector.shape_cast %3 : vector<2x1x1x16xf32> to vector<2x16xf32>
    %c0_9 = arith.constant 0 : index
    %c0_10 = arith.constant 0 : index
    %c0_11 = arith.constant 0 : index
    %5 = vector.load %arg2[%c0_9, %c0_10, %c0_11] : memref<1x16x128xf32, #tpu.memory_space<vmem>>, vector<1x16x128xf32>
    %6 = vector.shape_cast %5 : vector<1x16x128xf32> to vector<16x128xf32>
    %cst = arith.constant dense<0.000000e+00> : vector<2x128xf32>
    %7 = tpu.matmul %4, %6, %cst {dimension_numbers = #tpu.dot_dimension_numbers<[1], [0], [0], [1], [0, 0, 1, 1], [], []>} : vector<2x16xf32>, vector<16x128xf32>, vector<2x128xf32> -> vector<2x128xf32>
    %8 = vector.broadcast %0 : vector<1x128xf32> to vector<2x128xf32>
    %9 = arith.addf %7, %8 : vector<2x128xf32>
    %cst_12 = arith.constant 0.000000e+00 : f32
    %10 = vector.broadcast %cst_12 : f32 to vector<2x128xf32>
    %11 = arith.maximumf %9, %10 : vector<2x128xf32>
    %12 = arith.truncf %11 : vector<2x128xf32> to vector<2x128xbf16>
    %cst_13 = arith.constant dense<0.000000e+00> : vector<2x128xf32>
    %13 = tpu.matmul %12, %2, %cst_13 {dimension_numbers = #tpu.dot_dimension_numbers<[1], [0], [0], [1], [0, 0, 1, 1], [], []>} : vector<2x128xbf16>, vector<128x128xbf16>, vector<2x128xf32> -> vector<2x128xf32>
    %14 = vector.broadcast %1 : vector<1x128xf32> to vector<2x128xf32>
    %15 = arith.addf %13, %14 : vector<2x128xf32>
    %c0_14 = arith.constant 0 : index
    %c0_15 = arith.constant 0 : index
    %c0_16 = arith.constant 0 : index
    %16 = vector.load %arg6[%c0_14, %c0_15, %c0_16] : memref<2x8x128xf32, #tpu.memory_space<vmem>>, vector<2x1x128xf32>
    %17 = vector.shape_cast %16 : vector<2x1x128xf32> to vector<2x128xf32>
    %18 = vector.shape_cast %15 : vector<2x128xf32> to vector<2x1x128xf32>
    tpu.vector_store %arg6[%c0_14, %c0_15, %c0_16], %18 {strides = array<i32>} : memref<2x8x128xf32, #tpu.memory_space<vmem>>, vector<2x1x128xf32>,
    %c0_17 = arith.constant 0 : index
    %c0_18 = arith.constant 0 : index
    %c0_19 = arith.constant 0 : index
    %c16 = arith.constant 16 : index
    %19 = vector.load %arg1[%c0_17, %c0_18, %c0_19, %c16] : memref<2x1x1x128xf32, #tpu.memory_space<vmem>>, vector<2x1x1x16xf32>
    %20 = vector.shape_cast %19 : vector<2x1x1x16xf32> to vector<2x16xf32>
    %c0_20 = arith.constant 0 : index
    %c0_21 = arith.constant 0 : index
    %c0_22 = arith.constant 0 : index
    %21 = vector.load %arg2[%c0_20, %c0_21, %c0_22] : memref<1x16x128xf32, #tpu.memory_space<vmem>>, vector<1x16x128xf32>
    %22 = vector.shape_cast %21 : vector<1x16x128xf32> to vector<16x128xf32>
    %cst_23 = arith.constant dense<0.000000e+00> : vector<2x128xf32>
    %23 = tpu.matmul %20, %22, %cst_23 {dimension_numbers = #tpu.dot_dimension_numbers<[1], [0], [0], [1], [0, 0, 1, 1], [], []>} : vector<2x16xf32>, vector<16x128xf32>, vector<2x128xf32> -> vector<2x128xf32>
    %24 = vector.broadcast %0 : vector<1x128xf32> to vector<2x128xf32>
    %25 = arith.addf %23, %24 : vector<2x128xf32>
    %cst_24 = arith.constant 0.000000e+00 : f32
    %26 = vector.broadcast %cst_24 : f32 to vector<2x128xf32>
    %27 = arith.maximumf %25, %26 : vector<2x128xf32>
    %28 = arith.truncf %27 : vector<2x128xf32> to vector<2x128xbf16>
    %cst_25 = arith.constant dense<0.000000e+00> : vector<2x128xf32>
    %29 = tpu.matmul %28, %2, %cst_25 {dimension_numbers = #tpu.dot_dimension_numbers<[1], [0], [0], [1], [0, 0, 1, 1], [], []>} : vector<2x128xbf16>, vector<128x128xbf16>, vector<2x128xf32> -> vector<2x128xf32>
    %30 = vector.broadcast %1 : vector<1x128xf32> to vector<2x128xf32>
    %31 = arith.addf %29, %30 : vector<2x128xf32>
    %c0_26 = arith.constant 0 : index
    %c1 = arith.constant 1 : index
    %c0_27 = arith.constant 0 : index
    %32 = vector.load %arg6[%c0_26, %c1, %c0_27] : memref<2x8x128xf32, #tpu.memory_space<vmem>>, vector<2x1x128xf32>
    %33 = vector.shape_cast %32 : vector<2x1x128xf32> to vector<2x128xf32>
    %34 = vector.shape_cast %31 : vector<2x128xf32> to vector<2x1x128xf32>
    tpu.vector_store %arg6[%c0_26, %c1, %c0_27], %34 {strides = array<i32>} : memref<2x8x128xf32, #tpu.memory_space<vmem>>, vector<2x1x128xf32>,
    %c0_28 = arith.constant 0 : index
    %c0_29 = arith.constant 0 : index
    %c0_30 = arith.constant 0 : index
    %c32 = arith.constant 32 : index
    %35 = vector.load %arg1[%c0_28, %c0_29, %c0_30, %c32] : memref<2x1x1x128xf32, #tpu.memory_space<vmem>>, vector<2x1x1x16xf32>
    %36 = vector.shape_cast %35 : vector<2x1x1x16xf32> to vector<2x16xf32>
    %c0_31 = arith.constant 0 : index
    %c0_32 = arith.constant 0 : index
    %c0_33 = arith.constant 0 : index
    %37 = vector.load %arg2[%c0_31, %c0_32, %c0_33] : memref<1x16x128xf32, #tpu.memory_space<vmem>>, vector<1x16x128xf32>
    %38 = vector.shape_cast %37 : vector<1x16x128xf32> to vector<16x128xf32>
    %cst_34 = arith.constant dense<0.000000e+00> : vector<2x128xf32>
    %39 = tpu.matmul %36, %38, %cst_34 {dimension_numbers = #tpu.dot_dimension_numbers<[1], [0], [0], [1], [0, 0, 1, 1], [], []>} : vector<2x16xf32>, vector<16x128xf32>, vector<2x128xf32> -> vector<2x128xf32>
    %40 = vector.broadcast %0 : vector<1x128xf32> to vector<2x128xf32>
    %41 = arith.addf %39, %40 : vector<2x128xf32>
    %cst_35 = arith.constant 0.000000e+00 : f32
    %42 = vector.broadcast %cst_35 : f32 to vector<2x128xf32>
    %43 = arith.maximumf %41, %42 : vector<2x128xf32>
    %44 = arith.truncf %43 : vector<2x128xf32> to vector<2x128xbf16>
    %cst_36 = arith.constant dense<0.000000e+00> : vector<2x128xf32>
    %45 = tpu.matmul %44, %2, %cst_36 {dimension_numbers = #tpu.dot_dimension_numbers<[1], [0], [0], [1], [0, 0, 1, 1], [], []>} : vector<2x128xbf16>, vector<128x128xbf16>, vector<2x128xf32> -> vector<2x128xf32>
    %46 = vector.broadcast %1 : vector<1x128xf32> to vector<2x128xf32>
    %47 = arith.addf %45, %46 : vector<2x128xf32>
    %c0_37 = arith.constant 0 : index
    %c2 = arith.constant 2 : index
    %c0_38 = arith.constant 0 : index
    %48 = vector.load %arg6[%c0_37, %c2, %c0_38] : memref<2x8x128xf32, #tpu.memory_space<vmem>>, vector<2x1x128xf32>
    %49 = vector.shape_cast %48 : vector<2x1x128xf32> to vector<2x128xf32>
    %50 = vector.shape_cast %47 : vector<2x128xf32> to vector<2x1x128xf32>
    tpu.vector_store %arg6[%c0_37, %c2, %c0_38], %50 {strides = array<i32>} : memref<2x8x128xf32, #tpu.memory_space<vmem>>, vector<2x1x128xf32>,
    %c0_39 = arith.constant 0 : index
    %c0_40 = arith.constant 0 : index
    %c0_41 = arith.constant 0 : index
    %c48 = arith.constant 48 : index
    %51 = vector.load %arg1[%c0_39, %c0_40, %c0_41, %c48] : memref<2x1x1x128xf32, #tpu.memory_space<vmem>>, vector<2x1x1x16xf32>
    %52 = vector.shape_cast %51 : vector<2x1x1x16xf32> to vector<2x16xf32>
    %c0_42 = arith.constant 0 : index
    %c0_43 = arith.constant 0 : index
    %c0_44 = arith.constant 0 : index
    %53 = vector.load %arg2[%c0_42, %c0_43, %c0_44] : memref<1x16x128xf32, #tpu.memory_space<vmem>>, vector<1x16x128xf32>
    %54 = vector.shape_cast %53 : vector<1x16x128xf32> to vector<16x128xf32>
    %cst_45 = arith.constant dense<0.000000e+00> : vector<2x128xf32>
    %55 = tpu.matmul %52, %54, %cst_45 {dimension_numbers = #tpu.dot_dimension_numbers<[1], [0], [0], [1], [0, 0, 1, 1], [], []>} : vector<2x16xf32>, vector<16x128xf32>, vector<2x128xf32> -> vector<2x128xf32>
    %56 = vector.broadcast %0 : vector<1x128xf32> to vector<2x128xf32>
    %57 = arith.addf %55, %56 : vector<2x128xf32>
    %cst_46 = arith.constant 0.000000e+00 : f32
    %58 = vector.broadcast %cst_46 : f32 to vector<2x128xf32>
    %59 = arith.maximumf %57, %58 : vector<2x128xf32>
    %60 = arith.truncf %59 : vector<2x128xf32> to vector<2x128xbf16>
    %cst_47 = arith.constant dense<0.000000e+00> : vector<2x128xf32>
    %61 = tpu.matmul %60, %2, %cst_47 {dimension_numbers = #tpu.dot_dimension_numbers<[1], [0], [0], [1], [0, 0, 1, 1], [], []>} : vector<2x128xbf16>, vector<128x128xbf16>, vector<2x128xf32> -> vector<2x128xf32>
    %62 = vector.broadcast %1 : vector<1x128xf32> to vector<2x128xf32>
    %63 = arith.addf %61, %62 : vector<2x128xf32>
    %c0_48 = arith.constant 0 : index
    %c3 = arith.constant 3 : index
    %c0_49 = arith.constant 0 : index
    %64 = vector.load %arg6[%c0_48, %c3, %c0_49] : memref<2x8x128xf32, #tpu.memory_space<vmem>>, vector<2x1x128xf32>
    %65 = vector.shape_cast %64 : vector<2x1x128xf32> to vector<2x128xf32>
    %66 = vector.shape_cast %63 : vector<2x128xf32> to vector<2x1x128xf32>
    tpu.vector_store %arg6[%c0_48, %c3, %c0_49], %66 {strides = array<i32>} : memref<2x8x128xf32, #tpu.memory_space<vmem>>, vector<2x1x128xf32>,
    %c0_50 = arith.constant 0 : index
    %c0_51 = arith.constant 0 : index
    %c0_52 = arith.constant 0 : index
    %c64 = arith.constant 64 : index
    %67 = vector.load %arg1[%c0_50, %c0_51, %c0_52, %c64] : memref<2x1x1x128xf32, #tpu.memory_space<vmem>>, vector<2x1x1x16xf32>
    %68 = vector.shape_cast %67 : vector<2x1x1x16xf32> to vector<2x16xf32>
    %c0_53 = arith.constant 0 : index
    %c0_54 = arith.constant 0 : index
    %c0_55 = arith.constant 0 : index
    %69 = vector.load %arg2[%c0_53, %c0_54, %c0_55] : memref<1x16x128xf32, #tpu.memory_space<vmem>>, vector<1x16x128xf32>
    %70 = vector.shape_cast %69 : vector<1x16x128xf32> to vector<16x128xf32>
    %cst_56 = arith.constant dense<0.000000e+00> : vector<2x128xf32>
    %71 = tpu.matmul %68, %70, %cst_56 {dimension_numbers = #tpu.dot_dimension_numbers<[1], [0], [0], [1], [0, 0, 1, 1], [], []>} : vector<2x16xf32>, vector<16x128xf32>, vector<2x128xf32> -> vector<2x128xf32>
    %72 = vector.broadcast %0 : vector<1x128xf32> to vector<2x128xf32>
    %73 = arith.addf %71, %72 : vector<2x128xf32>
    %cst_57 = arith.constant 0.000000e+00 : f32
    %74 = vector.broadcast %cst_57 : f32 to vector<2x128xf32>
    %75 = arith.maximumf %73, %74 : vector<2x128xf32>
    %76 = arith.truncf %75 : vector<2x128xf32> to vector<2x128xbf16>
    %cst_58 = arith.constant dense<0.000000e+00> : vector<2x128xf32>
    %77 = tpu.matmul %76, %2, %cst_58 {dimension_numbers = #tpu.dot_dimension_numbers<[1], [0], [0], [1], [0, 0, 1, 1], [], []>} : vector<2x128xbf16>, vector<128x128xbf16>, vector<2x128xf32> -> vector<2x128xf32>
    %78 = vector.broadcast %1 : vector<1x128xf32> to vector<2x128xf32>
    %79 = arith.addf %77, %78 : vector<2x128xf32>
    %c0_59 = arith.constant 0 : index
    %c4 = arith.constant 4 : index
    %c0_60 = arith.constant 0 : index
    %80 = vector.load %arg6[%c0_59, %c4, %c0_60] : memref<2x8x128xf32, #tpu.memory_space<vmem>>, vector<2x1x128xf32>
    %81 = vector.shape_cast %80 : vector<2x1x128xf32> to vector<2x128xf32>
    %82 = vector.shape_cast %79 : vector<2x128xf32> to vector<2x1x128xf32>
    tpu.vector_store %arg6[%c0_59, %c4, %c0_60], %82 {strides = array<i32>} : memref<2x8x128xf32, #tpu.memory_space<vmem>>, vector<2x1x128xf32>,
    %c0_61 = arith.constant 0 : index
    %c0_62 = arith.constant 0 : index
    %c0_63 = arith.constant 0 : index
    %c80 = arith.constant 80 : index
    %83 = vector.load %arg1[%c0_61, %c0_62, %c0_63, %c80] : memref<2x1x1x128xf32, #tpu.memory_space<vmem>>, vector<2x1x1x16xf32>
    %84 = vector.shape_cast %83 : vector<2x1x1x16xf32> to vector<2x16xf32>
    %c0_64 = arith.constant 0 : index
    %c0_65 = arith.constant 0 : index
    %c0_66 = arith.constant 0 : index
    %85 = vector.load %arg2[%c0_64, %c0_65, %c0_66] : memref<1x16x128xf32, #tpu.memory_space<vmem>>, vector<1x16x128xf32>
    %86 = vector.shape_cast %85 : vector<1x16x128xf32> to vector<16x128xf32>
    %cst_67 = arith.constant dense<0.000000e+00> : vector<2x128xf32>
    %87 = tpu.matmul %84, %86, %cst_67 {dimension_numbers = #tpu.dot_dimension_numbers<[1], [0], [0], [1], [0, 0, 1, 1], [], []>} : vector<2x16xf32>, vector<16x128xf32>, vector<2x128xf32> -> vector<2x128xf32>
    %88 = vector.broadcast %0 : vector<1x128xf32> to vector<2x128xf32>
    %89 = arith.addf %87, %88 : vector<2x128xf32>
    %cst_68 = arith.constant 0.000000e+00 : f32
    %90 = vector.broadcast %cst_68 : f32 to vector<2x128xf32>
    %91 = arith.maximumf %89, %90 : vector<2x128xf32>
    %92 = arith.truncf %91 : vector<2x128xf32> to vector<2x128xbf16>
    %cst_69 = arith.constant dense<0.000000e+00> : vector<2x128xf32>
    %93 = tpu.matmul %92, %2, %cst_69 {dimension_numbers = #tpu.dot_dimension_numbers<[1], [0], [0], [1], [0, 0, 1, 1], [], []>} : vector<2x128xbf16>, vector<128x128xbf16>, vector<2x128xf32> -> vector<2x128xf32>
    %94 = vector.broadcast %1 : vector<1x128xf32> to vector<2x128xf32>
    %95 = arith.addf %93, %94 : vector<2x128xf32>
    %c0_70 = arith.constant 0 : index
    %c5 = arith.constant 5 : index
    %c0_71 = arith.constant 0 : index
    %96 = vector.load %arg6[%c0_70, %c5, %c0_71] : memref<2x8x128xf32, #tpu.memory_space<vmem>>, vector<2x1x128xf32>
    %97 = vector.shape_cast %96 : vector<2x1x128xf32> to vector<2x128xf32>
    %98 = vector.shape_cast %95 : vector<2x128xf32> to vector<2x1x128xf32>
    tpu.vector_store %arg6[%c0_70, %c5, %c0_71], %98 {strides = array<i32>} : memref<2x8x128xf32, #tpu.memory_space<vmem>>, vector<2x1x128xf32>,
    %c0_72 = arith.constant 0 : index
    %c0_73 = arith.constant 0 : index
    %c0_74 = arith.constant 0 : index
    %c96 = arith.constant 96 : index
    %99 = vector.load %arg1[%c0_72, %c0_73, %c0_74, %c96] : memref<2x1x1x128xf32, #tpu.memory_space<vmem>>, vector<2x1x1x16xf32>
    %100 = vector.shape_cast %99 : vector<2x1x1x16xf32> to vector<2x16xf32>
    %c0_75 = arith.constant 0 : index
    %c0_76 = arith.constant 0 : index
    %c0_77 = arith.constant 0 : index
    %101 = vector.load %arg2[%c0_75, %c0_76, %c0_77] : memref<1x16x128xf32, #tpu.memory_space<vmem>>, vector<1x16x128xf32>
    %102 = vector.shape_cast %101 : vector<1x16x128xf32> to vector<16x128xf32>
    %cst_78 = arith.constant dense<0.000000e+00> : vector<2x128xf32>
    %103 = tpu.matmul %100, %102, %cst_78 {dimension_numbers = #tpu.dot_dimension_numbers<[1], [0], [0], [1], [0, 0, 1, 1], [], []>} : vector<2x16xf32>, vector<16x128xf32>, vector<2x128xf32> -> vector<2x128xf32>
    %104 = vector.broadcast %0 : vector<1x128xf32> to vector<2x128xf32>
    %105 = arith.addf %103, %104 : vector<2x128xf32>
    %cst_79 = arith.constant 0.000000e+00 : f32
    %106 = vector.broadcast %cst_79 : f32 to vector<2x128xf32>
    %107 = arith.maximumf %105, %106 : vector<2x128xf32>
    %108 = arith.truncf %107 : vector<2x128xf32> to vector<2x128xbf16>
    %cst_80 = arith.constant dense<0.000000e+00> : vector<2x128xf32>
    %109 = tpu.matmul %108, %2, %cst_80 {dimension_numbers = #tpu.dot_dimension_numbers<[1], [0], [0], [1], [0, 0, 1, 1], [], []>} : vector<2x128xbf16>, vector<128x128xbf16>, vector<2x128xf32> -> vector<2x128xf32>
    %110 = vector.broadcast %1 : vector<1x128xf32> to vector<2x128xf32>
    %111 = arith.addf %109, %110 : vector<2x128xf32>
    %c0_81 = arith.constant 0 : index
    %c6 = arith.constant 6 : index
    %c0_82 = arith.constant 0 : index
    %112 = vector.load %arg6[%c0_81, %c6, %c0_82] : memref<2x8x128xf32, #tpu.memory_space<vmem>>, vector<2x1x128xf32>
    %113 = vector.shape_cast %112 : vector<2x1x128xf32> to vector<2x128xf32>
    %114 = vector.shape_cast %111 : vector<2x128xf32> to vector<2x1x128xf32>
    tpu.vector_store %arg6[%c0_81, %c6, %c0_82], %114 {strides = array<i32>} : memref<2x8x128xf32, #tpu.memory_space<vmem>>, vector<2x1x128xf32>,
    %c0_83 = arith.constant 0 : index
    %c0_84 = arith.constant 0 : index
    %c0_85 = arith.constant 0 : index
    %c112 = arith.constant 112 : index
    %115 = vector.load %arg1[%c0_83, %c0_84, %c0_85, %c112] : memref<2x1x1x128xf32, #tpu.memory_space<vmem>>, vector<2x1x1x16xf32>
    %116 = vector.shape_cast %115 : vector<2x1x1x16xf32> to vector<2x16xf32>
    %c0_86 = arith.constant 0 : index
    %c0_87 = arith.constant 0 : index
    %c0_88 = arith.constant 0 : index
    %117 = vector.load %arg2[%c0_86, %c0_87, %c0_88] : memref<1x16x128xf32, #tpu.memory_space<vmem>>, vector<1x16x128xf32>
    %118 = vector.shape_cast %117 : vector<1x16x128xf32> to vector<16x128xf32>
    %cst_89 = arith.constant dense<0.000000e+00> : vector<2x128xf32>
    %119 = tpu.matmul %116, %118, %cst_89 {dimension_numbers = #tpu.dot_dimension_numbers<[1], [0], [0], [1], [0, 0, 1, 1], [], []>} : vector<2x16xf32>, vector<16x128xf32>, vector<2x128xf32> -> vector<2x128xf32>
    %120 = vector.broadcast %0 : vector<1x128xf32> to vector<2x128xf32>
    %121 = arith.addf %119, %120 : vector<2x128xf32>
    %cst_90 = arith.constant 0.000000e+00 : f32
    %122 = vector.broadcast %cst_90 : f32 to vector<2x128xf32>
    %123 = arith.maximumf %121, %122 : vector<2x128xf32>
    %124 = arith.truncf %123 : vector<2x128xf32> to vector<2x128xbf16>
    %cst_91 = arith.constant dense<0.000000e+00> : vector<2x128xf32>
    %125 = tpu.matmul %124, %2, %cst_91 {dimension_numbers = #tpu.dot_dimension_numbers<[1], [0], [0], [1], [0, 0, 1, 1], [], []>} : vector<2x128xbf16>, vector<128x128xbf16>, vector<2x128xf32> -> vector<2x128xf32>
    %126 = vector.broadcast %1 : vector<1x128xf32> to vector<2x128xf32>
    %127 = arith.addf %125, %126 : vector<2x128xf32>
    %c0_92 = arith.constant 0 : index
    %c7 = arith.constant 7 : index
    %c0_93 = arith.constant 0 : index
    %128 = vector.load %arg6[%c0_92, %c7, %c0_93] : memref<2x8x128xf32, #tpu.memory_space<vmem>>, vector<2x1x128xf32>
    %129 = vector.shape_cast %128 : vector<2x1x128xf32> to vector<2x128xf32>
    %130 = vector.shape_cast %127 : vector<2x128xf32> to vector<2x1x128xf32>
    tpu.vector_store %arg6[%c0_92, %c7, %c0_93], %130 {strides = array<i32>} : memref<2x8x128xf32, #tpu.memory_space<vmem>>, vector<2x1x128xf32>,
    return
  }
  func.func @transform_0(%arg0: i32) -> (i32, i32, i32, i32) {
    %c0_i32 = arith.constant 0 : i32
    %c0_i32_0 = arith.constant 0 : i32
    %c0_i32_1 = arith.constant 0 : i32
    %c0_i32_2 = arith.constant 0 : i32
    return %arg0, %c0_i32, %c0_i32_0, %c0_i32_1 : i32, i32, i32, i32
  }
  func.func @transform_1(%arg0: i32) -> (i32, i32, i32) {
    %c0_i32 = arith.constant 0 : i32
    %c0_i32_0 = arith.constant 0 : i32
    %c0_i32_1 = arith.constant 0 : i32
    %c0_i32_2 = arith.constant 0 : i32
    return %c0_i32, %c0_i32_0, %c0_i32_1 : i32, i32, i32
  }
  func.func @transform_2(%arg0: i32) -> (i32, i32) {
    %c0_i32 = arith.constant 0 : i32
    %c0_i32_0 = arith.constant 0 : i32
    %c0_i32_1 = arith.constant 0 : i32
    return %c0_i32, %c0_i32_0 : i32, i32
  }
  func.func @transform_3(%arg0: i32) -> (i32, i32) {
    %c0_i32 = arith.constant 0 : i32
    %c0_i32_0 = arith.constant 0 : i32
    %c0_i32_1 = arith.constant 0 : i32
    return %c0_i32, %c0_i32_0 : i32, i32
  }
  func.func @transform_4(%arg0: i32) -> (i32, i32) {
    %c0_i32 = arith.constant 0 : i32
    %c0_i32_0 = arith.constant 0 : i32
    %c0_i32_1 = arith.constant 0 : i32
    return %c0_i32, %c0_i32_0 : i32, i32
  }
  func.func @transform_5(%arg0: i32) -> (i32, i32, i32) {
    %c0_i32 = arith.constant 0 : i32
    %c0_i32_0 = arith.constant 0 : i32
    %c0_i32_1 = arith.constant 0 : i32
    return %arg0, %c0_i32, %c0_i32_0 : i32, i32, i32
  }
}

</mosaic_0001>

<llo_original>
// kernel: tpu_custom_call.1
$region0: #{tpu_custom_call.1}
  #allocation0 [shape = 'u32[]', space=smem, size = 0x4, offset = 0x4, fixed_abs, tag = 'smem constant byte address 0x4 - core index']
  #allocation1 [shape = 'u32[144,128]{1,0:T(1,128)}', space=vmem, size = 0x12000, scoped, tag = 'internal scratch']
  %s0 = inlined_call_operand.hbm [shape: f32[2,3,1,128], index: 0, kind: input, shape index: {}]
  %s1 = inlined_call_operand.hbm [shape: f32[1,16,128], index: 1, kind: input, shape index: {}]
  %s2 = inlined_call_operand.vmem [shape: f32[1,128], index: 2, kind: input, shape index: {}]
  %s3 = inlined_call_operand.hbm [shape: bf16[128,128], index: 3, kind: input, shape index: {}]
  %s4 = inlined_call_operand.vmem [shape: f32[1,128], index: 4, kind: input, shape index: {}]
  %s5 = inlined_call_operand.hbm [shape: f32[2,8,128], index: 5, kind: output, shape index: {}]
  %s6 = sld [smem:[#allocation0]]
  $region42: #{tpu_custom_call.1} parent=0
    _
  %s8 = ssub.s32 1, %s6
  %s9 = scalar_select 0, %s8, %s6
  $region1: #{tpu_custom_call.1} parent=0
    #allocation2 [shape = 'u8[1024]{0}', space=vmem, size = 0x400, scoped, tag = 'input window, operand 0, single buffered']
    #allocation3 [shape = 's32[1]{0}', space=sflag, size = 0x4, scoped, tag = 'scoped memory for tpu_custom_call.1']
    #allocation4 [shape = 's32[1]{0}', space=sflag, size = 0x4, scoped, tag = 'scoped memory for tpu_custom_call.1']
    #allocation5 [shape = 'u8[8192]{0}', space=vmem, size = 0x2000, scoped, tag = 'input window, operand 1, single buffered']
    #allocation6 [shape = 's32[1]{0}', space=sflag, size = 0x4, scoped, tag = 'scoped memory for tpu_custom_call.1']
    #allocation7 [shape = 'u8[32768]{0}', space=vmem, size = 0x8000, scoped, tag = 'input window, operand 3, single buffered']
    #allocation8 [shape = 'u8[8192]{0}', space=vmem, size = 0x2000, scoped, tag = 'output window, operand 0, single buffered']
    %10 = vsyncpa [#allocation3], 0
    %11 = vsyncpa [#allocation6], 0
    %12 = vsyncpa [#allocation4], 0
    // Predicated region
    $region2: #{tpu_custom_call.1} parent=1 // pred_check
      _
    $region3: #{tpu_custom_call.1} parent=1 // pred_check_branch
      %14 = sbr.rel (0) target = $region5
    $region4: #{tpu_custom_call.1} parent=1 // pred_region
      %s16 = ssub.s32 32, 32
      %17 = vsyncadd [#allocation3], %s16
      %s18 = sshll.u32 [#allocation2], 4
      %s19 = int_to_ptr.vmem [resolvable:$true] %s18
      %24 = dma.hbm_to_vmem [thread:$0]  %s0, 32, %s19, [#allocation3], 48, 16, 1
    $region5: #{tpu_custom_call.1} parent=1 // pred_fallthru
      _
    // Predicated region
    $region6: #{tpu_custom_call.1} parent=1 // pred_check
      _
    $region7: #{tpu_custom_call.1} parent=1 // pred_check_branch
      %26 = sbr.rel (0) target = $region9
    $region8: #{tpu_custom_call.1} parent=1 // pred_region
      %s28 = ssub.s32 256, 256
      %29 = vsyncadd [#allocation6], %s28
      %s30 = sshll.u32 [#allocation5], 4
      %s31 = int_to_ptr.vmem [resolvable:$true] %s30
      %36 = dma.hbm_to_vmem [thread:$0]  %s1, 256, %s31, [#allocation6], 128, 128, 8
    $region9: #{tpu_custom_call.1} parent=1 // pred_fallthru
      _
    // Predicated region
    $region10: #{tpu_custom_call.1} parent=1 // pred_check
      _
    $region11: #{tpu_custom_call.1} parent=1 // pred_check_branch
      %38 = sbr.rel (0) target = $region13
    $region12: #{tpu_custom_call.1} parent=1 // pred_region
      _
    $region13: #{tpu_custom_call.1} parent=1 // pred_fallthru
      _
    // Predicated region
    $region14: #{tpu_custom_call.1} parent=1 // pred_check
      _
    $region15: #{tpu_custom_call.1} parent=1 // pred_check_branch
      %40 = sbr.rel (0) target = $region17
    $region16: #{tpu_custom_call.1} parent=1 // pred_region
      %s42 = ssub.s32 1024, 1024
      %43 = vsyncadd [#allocation6], %s42
      %s44 = sshll.u32 [#allocation7], 4
      %s45 = int_to_ptr.vmem [resolvable:$true] %s44
      %50 = dma.hbm_to_vmem [thread:$0]  %s3, 1024, %s45, [#allocation6], 64, 64, 4
    $region17: #{tpu_custom_call.1} parent=1 // pred_fallthru
      _
    // Predicated region
    $region18: #{tpu_custom_call.1} parent=1 // pred_check
      _
    $region19: #{tpu_custom_call.1} parent=1 // pred_check_branch
      %52 = sbr.rel (0) target = $region21
    $region20: #{tpu_custom_call.1} parent=1 // pred_region
      _
    $region21: #{tpu_custom_call.1} parent=1 // pred_fallthru
      _
    // Predicated region
    $region22: #{tpu_custom_call.1} parent=1 // pred_check
      _
    $region23: #{tpu_custom_call.1} parent=1 // pred_check_branch
      %54 = sbr.rel (0) target = $region25
    $region24: #{tpu_custom_call.1} parent=1 // pred_region
      %55 = dma.done [#allocation3], 32
    $region25: #{tpu_custom_call.1} parent=1 // pred_fallthru
      _
    // Predicated region
    $region26: #{tpu_custom_call.1} parent=1 // pred_check
      _
    $region27: #{tpu_custom_call.1} parent=1 // pred_check_branch
      %57 = sbr.rel (0) target = $region29
    $region28: #{tpu_custom_call.1} parent=1 // pred_region
      %58 = dma.done [#allocation6], 256
    $region29: #{tpu_custom_call.1} parent=1 // pred_fallthru
      _
    // Predicated region
    $region30: #{tpu_custom_call.1} parent=1 // pred_check
      _
    $region31: #{tpu_custom_call.1} parent=1 // pred_check_branch
      %60 = sbr.rel (0) target = $region33
    $region32: #{tpu_custom_call.1} parent=1 // pred_region
      %61 = dma.done [#allocation6], 1024
    $region33: #{tpu_custom_call.1} parent=1 // pred_fallthru
      _
    %v63 = vld [vmem:[%s2] sm:$0x1]
    %v64 = vld [vmem:[%s4] sm:$0x1]
    %v65 = vld [vmem:[#allocation7] sm:$0xf]
    %v66 = vld [vmem:[#allocation7 + $0x4] sm:$0xf]
    %v67 = vld [vmem:[#allocation7 + $0x8] sm:$0xf]
    %v68 = vld [vmem:[#allocation7 + $0xc] sm:$0xf]
    %v69 = vld [vmem:[#allocation7 + $0x10] sm:$0xf]
    %v70 = vld [vmem:[#allocation7 + $0x14] sm:$0xf]
    %v71 = vld [vmem:[#allocation7 + $0x18] sm:$0xf]
    %v72 = vld [vmem:[#allocation7 + $0x1c] sm:$0xf]
    %v73 = vld [vmem:[#allocation7 + $0x20] sm:$0xf]
    %v74 = vld [vmem:[#allocation7 + $0x24] sm:$0xf]
    %v75 = vld [vmem:[#allocation7 + $0x28] sm:$0xf]
    %v76 = vld [vmem:[#allocation7 + $0x2c] sm:$0xf]
    %v77 = vld [vmem:[#allocation7 + $0x30] sm:$0xf]
    %v78 = vld [vmem:[#allocation7 + $0x34] sm:$0xf]
    %v79 = vld [vmem:[#allocation7 + $0x38] sm:$0xf]
    %v80 = vld [vmem:[#allocation7 + $0x3c] sm:$0xf]
    %v81 = vld [vmem:[#allocation2] sm:$0x1]
    %v82 = vld [vmem:[#allocation2 + $0x1] sm:$0x1]
    %v83 = vld [vmem:[#allocation5] sm:$0xff]
    %v84 = vld [vmem:[#allocation5 + $0x8] sm:$0xff]
    %v86 = vlaneseq
    %v87 = vshrl.u32 %v86, 7
    %v88 = vsub.s32 0, %v87
    %v89 = vrot.slane %v63, %v88
    %v93 = vcombine.low %v81, %v82
    %v95 = vunpack.c.l.s4 1966171168
    %v96 = vunpack.c.0.s8 %v95
    %v97 = vlaneseq
    %v98 = vshrl.u32 %v97, 7
    %v99 = vsub.s32 %v96, %v98
    %v100 = vrot.slane %v93, %v99
    %v102 = vunpack.c.l.s4 1966171168
    %v103 = vunpack.c.0.s8 %v102
    %v104 = vlaneseq
    %v105 = vshrl.u32 %v104, 7
    %v106 = vsub.s32 %v103, %v105
    %v107 = vrot.slane %v100, %v106
    %vm108 = vcmask 130048
    %v109 = vsel %vm108, %v107, 0
    %111 = vmatprep.subr.mxu0 0.0
    %112 = vmatpush1.msra.mxu0 0.0
    %113 = vmatprep.subr.mxu0 0.0
    %114 = vmatpush1.msra.mxu0 0.0
    %115 = vmatprep.subr.mxu0 0.0
    %116 = vmatpush1.msra.mxu0 0.0
    %117 = vmatprep.subr.mxu0 0.0
    %118 = vmatpush1.msra.mxu0 0.0
    %119 = vmatprep.subr.mxu0 0.0
    %120 = vmatpush1.msra.mxu0 0.0
    %121 = vmatprep.subr.mxu0 0.0
    %122 = vmatpush1.msra.mxu0 0.0
    %123 = vmatprep.subr.mxu0 0.0
    %124 = vmatpush1.msra.mxu0 0.0
    %125 = vmatprep.subr.mxu0 0.0
    %126 = vmatpush1.msra.mxu0 0.0
    %127 = vmatprep.subr.mxu0 0.0
    %128 = vmatpush1.msra.mxu0 0.0
    %129 = vmatprep.subr.mxu0 0.0
    %130 = vmatpush1.msra.mxu0 0.0
    %131 = vmatprep.subr.mxu0 0.0
    %132 = vmatpush1.msra.mxu0 0.0
    %133 = vmatprep.subr.mxu0 0.0
    %134 = vmatpush1.msra.mxu0 0.0
    %135 = vmatprep.subr.mxu0 0.0
    %136 = vmatpush1.msra.mxu0 0.0
    %137 = vmatprep.subr.mxu0 0.0
    %138 = vmatpush1.msra.mxu0 0.0
    %139 = vmatprep.subr.mxu0 0.0
    %140 = vmatpush1.msra.mxu0 %v84
    %141 = vmatprep.subr.mxu0 0.0
    %142 = vmatpush1.msra.mxu0 %v83
    %143 = vmatprep.subr.mxu0 0.0
    %144 = vmatpush2.msra.mxu0 0.0
    %145 = vmatprep.subr.mxu0 0.0
    %146 = vmatpush2.msra.mxu0 0.0
    %147 = vmatprep.subr.mxu0 0.0
    %148 = vmatpush2.msra.mxu0 0.0
    %149 = vmatprep.subr.mxu0 0.0
    %150 = vmatpush2.msra.mxu0 0.0
    %151 = vmatprep.subr.mxu0 0.0
    %152 = vmatpush2.msra.mxu0 0.0
    %153 = vmatprep.subr.mxu0 0.0
    %154 = vmatpush2.msra.mxu0 0.0
    %155 = vmatprep.subr.mxu0 0.0
    %156 = vmatpush2.msra.mxu0 0.0
    %157 = vmatprep.subr.mxu0 0.0
    %158 = vmatpush2.msra.mxu0 0.0
    %159 = vmatprep.subr.mxu0 0.0
    %160 = vmatpush2.msra.mxu0 0.0
    %161 = vmatprep.subr.mxu0 0.0
    %162 = vmatpush2.msra.mxu0 0.0
    %163 = vmatprep.subr.mxu0 0.0
    %164 = vmatpush2.msra.mxu0 0.0
    %165 = vmatprep.subr.mxu0 0.0
    %166 = vmatpush2.msra.mxu0 0.0
    %167 = vmatprep.subr.mxu0 0.0
    %168 = vmatpush2.msra.mxu0 0.0
    %169 = vmatprep.subr.mxu0 0.0
    %170 = vmatpush2.msra.mxu0 0.0
    %171 = vmatprep.subr.mxu0 0.0
    %172 = vmatpush2.msra.mxu0 0.0
    %173 = vmatprep.subr.mxu0 0.0
    %174 = vmatpush2.msra.mxu0 0.0
    %175 = vmatprep.mubr.f32.mxu0 0.0
    %176 = vmatmul.mubr.f32.gmra.mxu0 %v109
    %v177 = vpop.f32.mrf.mxu0
    %v178 = vadd.f32 %v89, %v177
    %v179 = vpop.f32.mrf.mxu0
    %180 = vdwg.mxu0
    %v181 = vmax.f32 %v178, 0.0
    %v182 = vpack.c.bf16 %v181, %v181
    %v184 = vlaneseq
    %v185 = vshrl.u32 %v184, 7
    %v186 = vsub.s32 0, %v185
    %v187 = vrot.slane %v64, %v186
    %v205 = vunpack.c.l.b16 %v65
    %v206 = vunpack.c.l.b16 %v66
    %v207 = vunpack.c.l.b16 %v67
    %v208 = vunpack.c.l.b16 %v68
    %v209 = vunpack.c.l.b16 %v69
    %v210 = vunpack.c.l.b16 %v70
    %v211 = vunpack.c.l.b16 %v71
    %v212 = vunpack.c.l.b16 %v72
    %v213 = vunpack.c.l.b16 %v73
    %v214 = vunpack.c.l.b16 %v74
    %v215 = vunpack.c.l.b16 %v75
    %v216 = vunpack.c.l.b16 %v76
    %v217 = vunpack.c.l.b16 %v77
    %v218 = vunpack.c.l.b16 %v78
    %v219 = vunpack.c.l.b16 %v79
    %v220 = vunpack.c.l.b16 %v80
    %v221 = vpack.c.b16 %v206, %v205
    %v222 = vpack.c.b16 %v208, %v207
    %v223 = vpack.c.b16 %v210, %v209
    %v224 = vpack.c.b16 %v212, %v211
    %v225 = vpack.c.b16 %v214, %v213
    %v226 = vpack.c.b16 %v216, %v215
    %v227 = vpack.c.b16 %v218, %v217
    %v228 = vpack.c.b16 %v220, %v219
    %237 = vmatprep.subr.bf16.mxu0 0
    %238 = vmatpush1.bf16.msra.mxu0 %v228
    %239 = vmatprep.subr.bf16.mxu0 0
    %240 = vmatpush1.bf16.msra.mxu0 %v227
    %241 = vmatprep.subr.bf16.mxu0 0
    %242 = vmatpush1.bf16.msra.mxu0 %v226
    %243 = vmatprep.subr.bf16.mxu0 0
    %244 = vmatpush1.bf16.msra.mxu0 %v225
    %245 = vmatprep.subr.bf16.mxu0 0
    %246 = vmatpush1.bf16.msra.mxu0 %v224
    %247 = vmatprep.subr.bf16.mxu0 0
    %248 = vmatpush1.bf16.msra.mxu0 %v223
    %249 = vmatprep.subr.bf16.mxu0 0
    %250 = vmatpush1.bf16.msra.mxu0 %v222
    %251 = vmatprep.subr.bf16.mxu0 0
    %252 = vmatpush1.bf16.msra.mxu0 %v221
    %253 = vmatprep.subr.bf16.mxu0 0
    %254 = vmatpush2.bf16.msra.mxu0 0
    %255 = vmatprep.subr.bf16.mxu0 0
    %256 = vmatpush2.bf16.msra.mxu0 0
    %257 = vmatprep.subr.bf16.mxu0 0
    %258 = vmatpush2.bf16.msra.mxu0 0
    %259 = vmatprep.subr.bf16.mxu0 0
    %260 = vmatpush2.bf16.msra.mxu0 0
    %261 = vmatprep.subr.bf16.mxu0 0
    %262 = vmatpush2.bf16.msra.mxu0 0
    %263 = vmatprep.subr.bf16.mxu0 0
    %264 = vmatpush2.bf16.msra.mxu0 0
    %265 = vmatprep.subr.bf16.mxu0 0
    %266 = vmatpush2.bf16.msra.mxu0 0
    %267 = vmatprep.subr.bf16.mxu0 0
    %268 = vmatpush2.bf16.msra.mxu0 0
    %269 = vmatprep.mubr.bf16.mxu0 0
    %270 = vmatmul.mubr.bf16.gmra.mxu0 %v182
    %v271 = vpop.f32.mrf.mxu0
    %v272 = vadd.f32 %v187, %v271
    %v273 = vpop.f32.mrf.mxu0
    %v274 = vpop.f32.mrf.mxu0
    %v275 = vpop.f32.mrf.mxu0
    %276 = vdwg.mxu0
    %v279 = vunpack.c.l.s4 1966171168
    %v280 = vunpack.c.0.s8 %v279
    %v281 = vlaneseq
    %v282 = vshrl.u32 %v281, 7
    %v283 = vsub.s32 %v280, %v282
    %v284 = vrot.slane %v272, %v283
    %v285 = vcombine.high %v284, %v284
    %v287 = vunpack.c.l.s4 1966171168
    %v288 = vunpack.c.0.s8 %v287
    %v289 = vlaneseq
    %v290 = vshrl.u32 %v289, 7
    %v291 = vsub.s32 %v288, %v290
    %v292 = vrot.slane %v284, %v291
    %v294 = vunpack.c.l.s4 1966171168
    %v295 = vunpack.c.0.s8 %v294
    %v296 = vlaneseq
    %v297 = vshrl.u32 %v296, 7
    %v298 = vsub.s32 %v295, %v297
    %v299 = vrot.slane %v285, %v298
    %302 = vst [vmem:[#allocation8] sm:$0x1] %v292
    %303 = vst [vmem:[#allocation8 + $0x8] sm:$0x1] %v299
    %v304 = vld [vmem:[#allocation2] sm:$0x1]
    %v305 = vld [vmem:[#allocation2 + $0x1] sm:$0x1]
    %v306 = vld [vmem:[#allocation5] sm:$0xff]
    %v307 = vld [vmem:[#allocation5 + $0x8] sm:$0xff]
    %v310 = vcombine.low %v304, %v305
    %v312 = vunpack.c.l.s4 1966171168
    %v313 = vunpack.c.0.s8 %v312
    %v314 = vlaneseq
    %v315 = vshrl.u32 %v314, 7
    %v316 = vsub.s32 %v313, %v315
    %v317 = vrot.slane %v310, %v316
    %v319 = vunpack.c.l.s4 1966171168
    %v320 = vunpack.c.0.s8 %v319
    %v321 = vlaneseq
    %v322 = vshrl.u32 %v321, 7
    %v323 = vsub.s32 %v320, %v322
    %v324 = vrot.slane %v317, %v323
    %325 = vrot.lane.b32.xlu0 %v324, 112
    %v326 = vpop.permute.xlu0 %325
    %v327 = vsel %vm108, %v326, 0
    %329 = vmatprep.subr.mxu0 0.0
    %330 = vmatpush1.msra.mxu0 0.0
    %331 = vmatprep.subr.mxu0 0.0
    %332 = vmatpush1.msra.mxu0 0.0
    %333 = vmatprep.subr.mxu0 0.0
    %334 = vmatpush1.msra.mxu0 0.0
    %335 = vmatprep.subr.mxu0 0.0
    %336 = vmatpush1.msra.mxu0 0.0
    %337 = vmatprep.subr.mxu0 0.0
    %338 = vmatpush1.msra.mxu0 0.0
    %339 = vmatprep.subr.mxu0 0.0
    %340 = vmatpush1.msra.mxu0 0.0
    %341 = vmatprep.subr.mxu0 0.0
    %342 = vmatpush1.msra.mxu0 0.0
    %343 = vmatprep.subr.mxu0 0.0
    %344 = vmatpush1.msra.mxu0 0.0
    %345 = vmatprep.subr.mxu0 0.0
    %346 = vmatpush1.msra.mxu0 0.0
    %347 = vmatprep.subr.mxu0 0.0
    %348 = vmatpush1.msra.mxu0 0.0
    %349 = vmatprep.subr.mxu0 0.0
    %350 = vmatpush1.msra.mxu0 0.0
    %351 = vmatprep.subr.mxu0 0.0
    %352 = vmatpush1.msra.mxu0 0.0
    %353 = vmatprep.subr.mxu0 0.0
    %354 = vmatpush1.msra.mxu0 0.0
    %355 = vmatprep.subr.mxu0 0.0
    %356 = vmatpush1.msra.mxu0 0.0
    %357 = vmatprep.subr.mxu0 0.0
    %358 = vmatpush1.msra.mxu0 %v307
    %359 = vmatprep.subr.mxu0 0.0
    %360 = vmatpush1.msra.mxu0 %v306
    %361 = vmatprep.subr.mxu0 0.0
    %362 = vmatpush2.msra.mxu0 0.0
    %363 = vmatprep.subr.mxu0 0.0
    %364 = vmatpush2.msra.mxu0 0.0
    %365 = vmatprep.subr.mxu0 0.0
    %366 = vmatpush2.msra.mxu0 0.0
    %367 = vmatprep.subr.mxu0 0.0
    %368 = vmatpush2.msra.mxu0 0.0
    %369 = vmatprep.subr.mxu0 0.0
    %370 = vmatpush2.msra.mxu0 0.0
    %371 = vmatprep.subr.mxu0 0.0
    %372 = vmatpush2.msra.mxu0 0.0
    %373 = vmatprep.subr.mxu0 0.0
    %374 = vmatpush2.msra.mxu0 0.0
    %375 = vmatprep.subr.mxu0 0.0
    %376 = vmatpush2.msra.mxu0 0.0
    %377 = vmatprep.subr.mxu0 0.0
    %378 = vmatpush2.msra.mxu0 0.0
    %379 = vmatprep.subr.mxu0 0.0
    %380 = vmatpush2.msra.mxu0 0.0
    %381 = vmatprep.subr.mxu0 0.0
    %382 = vmatpush2.msra.mxu0 0.0
    %383 = vmatprep.subr.mxu0 0.0
    %384 = vmatpush2.msra.mxu0 0.0
    %385 = vmatprep.subr.mxu0 0.0
    %386 = vmatpush2.msra.mxu0 0.0
    %387 = vmatprep.subr.mxu0 0.0
    %388 = vmatpush2.msra.mxu0 0.0
    %389 = vmatprep.subr.mxu0 0.0
    %390 = vmatpush2.msra.mxu0 0.0
    %391 = vmatprep.subr.mxu0 0.0
    %392 = vmatpush2.msra.mxu0 0.0
    %393 = vmatprep.mubr.f32.mxu0 0.0
    %394 = vmatmul.mubr.f32.gmra.mxu0 %v327
    %v395 = vpop.f32.mrf.mxu0
    %v396 = vadd.f32 %v89, %v395
    %v397 = vpop.f32.mrf.mxu0
    %398 = vdwg.mxu0
    %v399 = vmax.f32 %v396, 0.0
    %v400 = vpack.c.bf16 %v399, %v399
    %401 = vmatprep.subr.bf16.mxu0 0
    %402 = vmatpush1.bf16.msra.mxu0 %v228
    %403 = vmatprep.subr.bf16.mxu0 0
    %404 = vmatpush1.bf16.msra.mxu0 %v227
    %405 = vmatprep.subr.bf16.mxu0 0
    %406 = vmatpush1.bf16.msra.mxu0 %v226
    %407 = vmatprep.subr.bf16.mxu0 0
    %408 = vmatpush1.bf16.msra.mxu0 %v225
    %409 = vmatprep.subr.bf16.mxu0 0
    %410 = vmatpush1.bf16.msra.mxu0 %v224
    %411 = vmatprep.subr.bf16.mxu0 0
    %412 = vmatpush1.bf16.msra.mxu0 %v223
    %413 = vmatprep.subr.bf16.mxu0 0
    %414 = vmatpush1.bf16.msra.mxu0 %v222
    %415 = vmatprep.subr.bf16.mxu0 0
    %416 = vmatpush1.bf16.msra.mxu0 %v221
    %417 = vmatprep.subr.bf16.mxu0 0
    %418 = vmatpush2.bf16.msra.mxu0 0
    %419 = vmatprep.subr.bf16.mxu0 0
    %420 = vmatpush2.bf16.msra.mxu0 0
    %421 = vmatprep.subr.bf16.mxu0 0
    %422 = vmatpush2.bf16.msra.mxu0 0
    %423 = vmatprep.subr.bf16.mxu0 0
    %424 = vmatpush2.bf16.msra.mxu0 0
    %425 = vmatprep.subr.bf16.mxu0 0
    %426 = vmatpush2.bf16.msra.mxu0 0
    %427 = vmatprep.subr.bf16.mxu0 0
    %428 = vmatpush2.bf16.msra.mxu0 0
    %429 = vmatprep.subr.bf16.mxu0 0
    %430 = vmatpush2.bf16.msra.mxu0 0
    %431 = vmatprep.subr.bf16.mxu0 0
    %432 = vmatpush2.bf16.msra.mxu0 0
    %433 = vmatprep.mubr.bf16.mxu0 0
    %434 = vmatmul.mubr.bf16.gmra.mxu0 %v400
    %v435 = vpop.f32.mrf.mxu0
    %v436 = vadd.f32 %v187, %v435
    %v437 = vpop.f32.mrf.mxu0
    %v438 = vpop.f32.mrf.mxu0
    %v439 = vpop.f32.mrf.mxu0
    %440 = vdwg.mxu0
    %v443 = vunpack.c.l.s4 1966171168
    %v444 = vunpack.c.0.s8 %v443
    %v445 = vlaneseq
    %v446 = vshrl.u32 %v445, 7
    %v447 = vsub.s32 %v444, %v446
    %v448 = vrot.slane %v436, %v447
    %v449 = vcombine.high %v448, %v448
    %v451 = vunpack.c.l.s4 1966171168
    %v452 = vunpack.c.0.s8 %v451
    %v453 = vlaneseq
    %v454 = vshrl.u32 %v453, 7
    %v455 = vsub.s32 %v452, %v454
    %v456 = vrot.slane %v448, %v455
    %v458 = vunpack.c.l.s4 1966171168
    %v459 = vunpack.c.0.s8 %v458
    %v460 = vlaneseq
    %v461 = vshrl.u32 %v460, 7
    %v462 = vsub.s32 %v459, %v461
    %v463 = vrot.slane %v449, %v462
    %466 = vst [vmem:[#allocation8 + $0x1] sm:$0x1] %v456
    %467 = vst [vmem:[#allocation8 + $0x9] sm:$0x1] %v463
    %v468 = vld [vmem:[#allocation2] sm:$0x1]
    %v469 = vld [vmem:[#allocation2 + $0x1] sm:$0x1]
    %v470 = vld [vmem:[#allocation5] sm:$0xff]
    %v471 = vld [vmem:[#allocation5 + $0x8] sm:$0xff]
    %v474 = vcombine.low %v468, %v469
    %v476 = vunpack.c.l.s4 1966171168
    %v477 = vunpack.c.0.s8 %v476
    %v478 = vlaneseq
    %v479 = vshrl.u32 %v478, 7
    %v480 = vsub.s32 %v477, %v479
    %v481 = vrot.slane %v474, %v480
    %v483 = vunpack.c.l.s4 1966171168
    %v484 = vunpack.c.0.s8 %v483
    %v485 = vlaneseq
    %v486 = vshrl.u32 %v485, 7
    %v487 = vsub.s32 %v484, %v486
    %v488 = vrot.slane %v481, %v487
    %489 = vrot.lane.b32.xlu0 %v488, 96
    %v490 = vpop.permute.xlu0 %489
    %v491 = vsel %vm108, %v490, 0
    %493 = vmatprep.subr.mxu0 0.0
    %494 = vmatpush1.msra.mxu0 0.0
    %495 = vmatprep.subr.mxu0 0.0
    %496 = vmatpush1.msra.mxu0 0.0
    %497 = vmatprep.subr.mxu0 0.0
    %498 = vmatpush1.msra.mxu0 0.0
    %499 = vmatprep.subr.mxu0 0.0
    %500 = vmatpush1.msra.mxu0 0.0
    %501 = vmatprep.subr.mxu0 0.0
    %502 = vmatpush1.msra.mxu0 0.0
    %503 = vmatprep.subr.mxu0 0.0
    %504 = vmatpush1.msra.mxu0 0.0
    %505 = vmatprep.subr.mxu0 0.0
    %506 = vmatpush1.msra.mxu0 0.0
    %507 = vmatprep.subr.mxu0 0.0
    %508 = vmatpush1.msra.mxu0 0.0
    %509 = vmatprep.subr.mxu0 0.0
    %510 = vmatpush1.msra.mxu0 0.0
    %511 = vmatprep.subr.mxu0 0.0
    %512 = vmatpush1.msra.mxu0 0.0
    %513 = vmatprep.subr.mxu0 0.0
    %514 = vmatpush1.msra.mxu0 0.0
    %515 = vmatprep.subr.mxu0 0.0
    %516 = vmatpush1.msra.mxu0 0.0
    %517 = vmatprep.subr.mxu0 0.0
    %518 = vmatpush1.msra.mxu0 0.0
    %519 = vmatprep.subr.mxu0 0.0
    %520 = vmatpush1.msra.mxu0 0.0
    %521 = vmatprep.subr.mxu0 0.0
    %522 = vmatpush1.msra.mxu0 %v471
    %523 = vmatprep.subr.mxu0 0.0
    %524 = vmatpush1.msra.mxu0 %v470
    %525 = vmatprep.subr.mxu0 0.0
    %526 = vmatpush2.msra.mxu0 0.0
    %527 = vmatprep.subr.mxu0 0.0
    %528 = vmatpush2.msra.mxu0 0.0
    %529 = vmatprep.subr.mxu0 0.0
    %530 = vmatpush2.msra.mxu0 0.0
    %531 = vmatprep.subr.mxu0 0.0
    %532 = vmatpush2.msra.mxu0 0.0
    %533 = vmatprep.subr.mxu0 0.0
    %534 = vmatpush2.msra.mxu0 0.0
    %535 = vmatprep.subr.mxu0 0.0
    %536 = vmatpush2.msra.mxu0 0.0
    %537 = vmatprep.subr.mxu0 0.0
    %538 = vmatpush2.msra.mxu0 0.0
    %539 = vmatprep.subr.mxu0 0.0
    %540 = vmatpush2.msra.mxu0 0.0
    %541 = vmatprep.subr.mxu0 0.0
    %542 = vmatpush2.msra.mxu0 0.0
    %543 = vmatprep.subr.mxu0 0.0
    %544 = vmatpush2.msra.mxu0 0.0
    %545 = vmatprep.subr.mxu0 0.0
    %546 = vmatpush2.msra.mxu0 0.0
    %547 = vmatprep.subr.mxu0 0.0
    %548 = vmatpush2.msra.mxu0 0.0
    %549 = vmatprep.subr.mxu0 0.0
    %550 = vmatpush2.msra.mxu0 0.0
    %551 = vmatprep.subr.mxu0 0.0
    %552 = vmatpush2.msra.mxu0 0.0
    %553 = vmatprep.subr.mxu0 0.0
    %554 = vmatpush2.msra.mxu0 0.0
    %555 = vmatprep.subr.mxu0 0.0
    %556 = vmatpush2.msra.mxu0 0.0
    %557 = vmatprep.mubr.f32.mxu0 0.0
    %558 = vmatmul.mubr.f32.gmra.mxu0 %v491
    %v559 = vpop.f32.mrf.mxu0
    %v560 = vadd.f32 %v89, %v559
    %v561 = vpop.f32.mrf.mxu0
    %562 = vdwg.mxu0
    %v563 = vmax.f32 %v560, 0.0
    %v564 = vpack.c.bf16 %v563, %v563
    %565 = vmatprep.subr.bf16.mxu0 0
    %566 = vmatpush1.bf16.msra.mxu0 %v228
    %567 = vmatprep.subr.bf16.mxu0 0
    %568 = vmatpush1.bf16.msra.mxu0 %v227
    %569 = vmatprep.subr.bf16.mxu0 0
    %570 = vmatpush1.bf16.msra.mxu0 %v226
    %571 = vmatprep.subr.bf16.mxu0 0
    %572 = vmatpush1.bf16.msra.mxu0 %v225
    %573 = vmatprep.subr.bf16.mxu0 0
    %574 = vmatpush1.bf16.msra.mxu0 %v224
    %575 = vmatprep.subr.bf16.mxu0 0
    %576 = vmatpush1.bf16.msra.mxu0 %v223
    %577 = vmatprep.subr.bf16.mxu0 0
    %578 = vmatpush1.bf16.msra.mxu0 %v222
    %579 = vmatprep.subr.bf16.mxu0 0
    %580 = vmatpush1.bf16.msra.mxu0 %v221
    %581 = vmatprep.subr.bf16.mxu0 0
    %582 = vmatpush2.bf16.msra.mxu0 0
    %583 = vmatprep.subr.bf16.mxu0 0
    %584 = vmatpush2.bf16.msra.mxu0 0
    %585 = vmatprep.subr.bf16.mxu0 0
    %586 = vmatpush2.bf16.msra.mxu0 0
    %587 = vmatprep.subr.bf16.mxu0 0
    %588 = vmatpush2.bf16.msra.mxu0 0
    %589 = vmatprep.subr.bf16.mxu0 0
    %590 = vmatpush2.bf16.msra.mxu0 0
    %591 = vmatprep.subr.bf16.mxu0 0
    %592 = vmatpush2.bf16.msra.mxu0 0
    %593 = vmatprep.subr.bf16.mxu0 0
    %594 = vmatpush2.bf16.msra.mxu0 0
    %595 = vmatprep.subr.bf16.mxu0 0
    %596 = vmatpush2.bf16.msra.mxu0 0
    %597 = vmatprep.mubr.bf16.mxu0 0
    %598 = vmatmul.mubr.bf16.gmra.mxu0 %v564
    %v599 = vpop.f32.mrf.mxu0
    %v600 = vadd.f32 %v187, %v599
    %v601 = vpop.f32.mrf.mxu0
    %v602 = vpop.f32.mrf.mxu0
    %v603 = vpop.f32.mrf.mxu0
    %604 = vdwg.mxu0
    %v607 = vunpack.c.l.s4 1966171168
    %v608 = vunpack.c.0.s8 %v607
    %v609 = vlaneseq
    %v610 = vshrl.u32 %v609, 7
    %v611 = vsub.s32 %v608, %v610
    %v612 = vrot.slane %v600, %v611
    %v613 = vcombine.high %v612, %v612
    %v615 = vunpack.c.l.s4 1966171168
    %v616 = vunpack.c.0.s8 %v615
    %v617 = vlaneseq
    %v618 = vshrl.u32 %v617, 7
    %v619 = vsub.s32 %v616, %v618
    %v620 = vrot.slane %v612, %v619
    %v622 = vunpack.c.l.s4 1966171168
    %v623 = vunpack.c.0.s8 %v622
    %v624 = vlaneseq
    %v625 = vshrl.u32 %v624, 7
    %v626 = vsub.s32 %v623, %v625
    %v627 = vrot.slane %v613, %v626
    %630 = vst [vmem:[#allocation8 + $0x2] sm:$0x1] %v620
    %631 = vst [vmem:[#allocation8 + $0xa] sm:$0x1] %v627
    %v632 = vld [vmem:[#allocation2] sm:$0x1]
    %v633 = vld [vmem:[#allocation2 + $0x1] sm:$0x1]
    %v634 = vld [vmem:[#allocation5] sm:$0xff]
    %v635 = vld [vmem:[#allocation5 + $0x8] sm:$0xff]
    %v638 = vcombine.low %v632, %v633
    %v640 = vunpack.c.l.s4 1966171168
    %v641 = vunpack.c.0.s8 %v640
    %v642 = vlaneseq
    %v643 = vshrl.u32 %v642, 7
    %v644 = vsub.s32 %v641, %v643
    %v645 = vrot.slane %v638, %v644
    %v647 = vunpack.c.l.s4 1966171168
    %v648 = vunpack.c.0.s8 %v647
    %v649 = vlaneseq
    %v650 = vshrl.u32 %v649, 7
    %v651 = vsub.s32 %v648, %v650
    %v652 = vrot.slane %v645, %v651
    %653 = vrot.lane.b32.xlu0 %v652, 80
    %v654 = vpop.permute.xlu0 %653
    %v655 = vsel %vm108, %v654, 0
    %657 = vmatprep.subr.mxu0 0.0
    %658 = vmatpush1.msra.mxu0 0.0
    %659 = vmatprep.subr.mxu0 0.0
    %660 = vmatpush1.msra.mxu0 0.0
    %661 = vmatprep.subr.mxu0 0.0
    %662 = vmatpush1.msra.mxu0 0.0
    %663 = vmatprep.subr.mxu0 0.0
    %664 = vmatpush1.msra.mxu0 0.0
    %665 = vmatprep.subr.mxu0 0.0
    %666 = vmatpush1.msra.mxu0 0.0
    %667 = vmatprep.subr.mxu0 0.0
    %668 = vmatpush1.msra.mxu0 0.0
    %669 = vmatprep.subr.mxu0 0.0
    %670 = vmatpush1.msra.mxu0 0.0
    %671 = vmatprep.subr.mxu0 0.0
    %672 = vmatpush1.msra.mxu0 0.0
    %673 = vmatprep.subr.mxu0 0.0
    %674 = vmatpush1.msra.mxu0 0.0
    %675 = vmatprep.subr.mxu0 0.0
    %676 = vmatpush1.msra.mxu0 0.0
    %677 = vmatprep.subr.mxu0 0.0
    %678 = vmatpush1.msra.mxu0 0.0
    %679 = vmatprep.subr.mxu0 0.0
    %680 = vmatpush1.msra.mxu0 0.0
    %681 = vmatprep.subr.mxu0 0.0
    %682 = vmatpush1.msra.mxu0 0.0
    %683 = vmatprep.subr.mxu0 0.0
    %684 = vmatpush1.msra.mxu0 0.0
    %685 = vmatprep.subr.mxu0 0.0
    %686 = vmatpush1.msra.mxu0 %v635
    %687 = vmatprep.subr.mxu0 0.0
    %688 = vmatpush1.msra.mxu0 %v634
    %689 = vmatprep.subr.mxu0 0.0
    %690 = vmatpush2.msra.mxu0 0.0
    %691 = vmatprep.subr.mxu0 0.0
    %692 = vmatpush2.msra.mxu0 0.0
    %693 = vmatprep.subr.mxu0 0.0
    %694 = vmatpush2.msra.mxu0 0.0
    %695 = vmatprep.subr.mxu0 0.0
    %696 = vmatpush2.msra.mxu0 0.0
    %697 = vmatprep.subr.mxu0 0.0
    %698 = vmatpush2.msra.mxu0 0.0
    %699 = vmatprep.subr.mxu0 0.0
    %700 = vmatpush2.msra.mxu0 0.0
    %701 = vmatprep.subr.mxu0 0.0
    %702 = vmatpush2.msra.mxu0 0.0
    %703 = vmatprep.subr.mxu0 0.0
    %704 = vmatpush2.msra.mxu0 0.0
    %705 = vmatprep.subr.mxu0 0.0
    %706 = vmatpush2.msra.mxu0 0.0
    %707 = vmatprep.subr.mxu0 0.0
    %708 = vmatpush2.msra.mxu0 0.0
    %709 = vmatprep.subr.mxu0 0.0
    %710 = vmatpush2.msra.mxu0 0.0
    %711 = vmatprep.subr.mxu0 0.0
    %712 = vmatpush2.msra.mxu0 0.0
    %713 = vmatprep.subr.mxu0 0.0
    %714 = vmatpush2.msra.mxu0 0.0
    %715 = vmatprep.subr.mxu0 0.0
    %716 = vmatpush2.msra.mxu0 0.0
    %717 = vmatprep.subr.mxu0 0.0
    %718 = vmatpush2.msra.mxu0 0.0
    %719 = vmatprep.subr.mxu0 0.0
    %720 = vmatpush2.msra.mxu0 0.0
    %721 = vmatprep.mubr.f32.mxu0 0.0
    %722 = vmatmul.mubr.f32.gmra.mxu0 %v655
    %v723 = vpop.f32.mrf.mxu0
    %v724 = vadd.f32 %v89, %v723
    %v725 = vpop.f32.mrf.mxu0
    %726 = vdwg.mxu0
    %v727 = vmax.f32 %v724, 0.0
    %v728 = vpack.c.bf16 %v727, %v727
    %729 = vmatprep.subr.bf16.mxu0 0
    %730 = vmatpush1.bf16.msra.mxu0 %v228
    %731 = vmatprep.subr.bf16.mxu0 0
    %732 = vmatpush1.bf16.msra.mxu0 %v227
    %733 = vmatprep.subr.bf16.mxu0 0
    %734 = vmatpush1.bf16.msra.mxu0 %v226
    %735 = vmatprep.subr.bf16.mxu0 0
    %736 = vmatpush1.bf16.msra.mxu0 %v225
    %737 = vmatprep.subr.bf16.mxu0 0
    %738 = vmatpush1.bf16.msra.mxu0 %v224
    %739 = vmatprep.subr.bf16.mxu0 0
    %740 = vmatpush1.bf16.msra.mxu0 %v223
    %741 = vmatprep.subr.bf16.mxu0 0
    %742 = vmatpush1.bf16.msra.mxu0 %v222
    %743 = vmatprep.subr.bf16.mxu0 0
    %744 = vmatpush1.bf16.msra.mxu0 %v221
    %745 = vmatprep.subr.bf16.mxu0 0
    %746 = vmatpush2.bf16.msra.mxu0 0
    %747 = vmatprep.subr.bf16.mxu0 0
    %748 = vmatpush2.bf16.msra.mxu0 0
    %749 = vmatprep.subr.bf16.mxu0 0
    %750 = vmatpush2.bf16.msra.mxu0 0
    %751 = vmatprep.subr.bf16.mxu0 0
    %752 = vmatpush2.bf16.msra.mxu0 0
    %753 = vmatprep.subr.bf16.mxu0 0
    %754 = vmatpush2.bf16.msra.mxu0 0
    %755 = vmatprep.subr.bf16.mxu0 0
    %756 = vmatpush2.bf16.msra.mxu0 0
    %757 = vmatprep.subr.bf16.mxu0 0
    %758 = vmatpush2.bf16.msra.mxu0 0
    %759 = vmatprep.subr.bf16.mxu0 0
    %760 = vmatpush2.bf16.msra.mxu0 0
    %761 = vmatprep.mubr.bf16.mxu0 0
    %762 = vmatmul.mubr.bf16.gmra.mxu0 %v728
    %v763 = vpop.f32.mrf.mxu0
    %v764 = vadd.f32 %v187, %v763
    %v765 = vpop.f32.mrf.mxu0
    %v766 = vpop.f32.mrf.mxu0
    %v767 = vpop.f32.mrf.mxu0
    %768 = vdwg.mxu0
    %v771 = vunpack.c.l.s4 1966171168
    %v772 = vunpack.c.0.s8 %v771
    %v773 = vlaneseq
    %v774 = vshrl.u32 %v773, 7
    %v775 = vsub.s32 %v772, %v774
    %v776 = vrot.slane %v764, %v775
    %v777 = vcombine.high %v776, %v776
    %v779 = vunpack.c.l.s4 1966171168
    %v780 = vunpack.c.0.s8 %v779
    %v781 = vlaneseq
    %v782 = vshrl.u32 %v781, 7
    %v783 = vsub.s32 %v780, %v782
    %v784 = vrot.slane %v776, %v783
    %v786 = vunpack.c.l.s4 1966171168
    %v787 = vunpack.c.0.s8 %v786
    %v788 = vlaneseq
    %v789 = vshrl.u32 %v788, 7
    %v790 = vsub.s32 %v787, %v789
    %v791 = vrot.slane %v777, %v790
    %794 = vst [vmem:[#allocation8 + $0x3] sm:$0x1] %v784
    %795 = vst [vmem:[#allocation8 + $0xb] sm:$0x1] %v791
    %v796 = vld [vmem:[#allocation2] sm:$0x1]
    %v797 = vld [vmem:[#allocation2 + $0x1] sm:$0x1]
    %v798 = vld [vmem:[#allocation5] sm:$0xff]
    %v799 = vld [vmem:[#allocation5 + $0x8] sm:$0xff]
    %v802 = vcombine.low %v796, %v797
    %v804 = vunpack.c.l.s4 1966171168
    %v805 = vunpack.c.0.s8 %v804
    %v806 = vlaneseq
    %v807 = vshrl.u32 %v806, 7
    %v808 = vsub.s32 %v805, %v807
    %v809 = vrot.slane %v802, %v808
    %v811 = vunpack.c.l.s4 1966171168
    %v812 = vunpack.c.0.s8 %v811
    %v813 = vlaneseq
    %v814 = vshrl.u32 %v813, 7
    %v815 = vsub.s32 %v812, %v814
    %v816 = vrot.slane %v809, %v815
    %817 = vrot.lane.b32.xlu0 %v816, 64
    %v818 = vpop.permute.xlu0 %817
    %v819 = vsel %vm108, %v818, 0
    %821 = vmatprep.subr.mxu0 0.0
    %822 = vmatpush1.msra.mxu0 0.0
    %823 = vmatprep.subr.mxu0 0.0
    %824 = vmatpush1.msra.mxu0 0.0
    %825 = vmatprep.subr.mxu0 0.0
    %826 = vmatpush1.msra.mxu0 0.0
    %827 = vmatprep.subr.mxu0 0.0
    %828 = vmatpush1.msra.mxu0 0.0
    %829 = vmatprep.subr.mxu0 0.0
    %830 = vmatpush1.msra.mxu0 0.0
    %831 = vmatprep.subr.mxu0 0.0
    %832 = vmatpush1.msra.mxu0 0.0
    %833 = vmatprep.subr.mxu0 0.0
    %834 = vmatpush1.msra.mxu0 0.0
    %835 = vmatprep.subr.mxu0 0.0
    %836 = vmatpush1.msra.mxu0 0.0
    %837 = vmatprep.subr.mxu0 0.0
    %838 = vmatpush1.msra.mxu0 0.0
    %839 = vmatprep.subr.mxu0 0.0
    %840 = vmatpush1.msra.mxu0 0.0
    %841 = vmatprep.subr.mxu0 0.0
    %842 = vmatpush1.msra.mxu0 0.0
    %843 = vmatprep.subr.mxu0 0.0
    %844 = vmatpush1.msra.mxu0 0.0
    %845 = vmatprep.subr.mxu0 0.0
    %846 = vmatpush1.msra.mxu0 0.0
    %847 = vmatprep.subr.mxu0 0.0
    %848 = vmatpush1.msra.mxu0 0.0
    %849 = vmatprep.subr.mxu0 0.0
    %850 = vmatpush1.msra.mxu0 %v799
    %851 = vmatprep.subr.mxu0 0.0
    %852 = vmatpush1.msra.mxu0 %v798
    %853 = vmatprep.subr.mxu0 0.0
    %854 = vmatpush2.msra.mxu0 0.0
    %855 = vmatprep.subr.mxu0 0.0
    %856 = vmatpush2.msra.mxu0 0.0
    %857 = vmatprep.subr.mxu0 0.0
    %858 = vmatpush2.msra.mxu0 0.0
    %859 = vmatprep.subr.mxu0 0.0
    %860 = vmatpush2.msra.mxu0 0.0
    %861 = vmatprep.subr.mxu0 0.0
    %862 = vmatpush2.msra.mxu0 0.0
    %863 = vmatprep.subr.mxu0 0.0
    %864 = vmatpush2.msra.mxu0 0.0
    %865 = vmatprep.subr.mxu0 0.0
    %866 = vmatpush2.msra.mxu0 0.0
    %867 = vmatprep.subr.mxu0 0.0
    %868 = vmatpush2.msra.mxu0 0.0
    %869 = vmatprep.subr.mxu0 0.0
    %870 = vmatpush2.msra.mxu0 0.0
    %871 = vmatprep.subr.mxu0 0.0
    %872 = vmatpush2.msra.mxu0 0.0
    %873 = vmatprep.subr.mxu0 0.0
    %874 = vmatpush2.msra.mxu0 0.0
    %875 = vmatprep.subr.mxu0 0.0
    %876 = vmatpush2.msra.mxu0 0.0
    %877 = vmatprep.subr.mxu0 0.0
    %878 = vmatpush2.msra.mxu0 0.0
    %879 = vmatprep.subr.mxu0 0.0
    %880 = vmatpush2.msra.mxu0 0.0
    %881 = vmatprep.subr.mxu0 0.0
    %882 = vmatpush2.msra.mxu0 0.0
    %883 = vmatprep.subr.mxu0 0.0
    %884 = vmatpush2.msra.mxu0 0.0
    %885 = vmatprep.mubr.f32.mxu0 0.0
    %886 = vmatmul.mubr.f32.gmra.mxu0 %v819
    %v887 = vpop.f32.mrf.mxu0
    %v888 = vadd.f32 %v89, %v887
    %v889 = vpop.f32.mrf.mxu0
    %890 = vdwg.mxu0
    %v891 = vmax.f32 %v888, 0.0
    %v892 = vpack.c.bf16 %v891, %v891
    %893 = vmatprep.subr.bf16.mxu0 0
    %894 = vmatpush1.bf16.msra.mxu0 %v228
    %895 = vmatprep.subr.bf16.mxu0 0
    %896 = vmatpush1.bf16.msra.mxu0 %v227
    %897 = vmatprep.subr.bf16.mxu0 0
    %898 = vmatpush1.bf16.msra.mxu0 %v226
    %899 = vmatprep.subr.bf16.mxu0 0
    %900 = vmatpush1.bf16.msra.mxu0 %v225
    %901 = vmatprep.subr.bf16.mxu0 0
    %902 = vmatpush1.bf16.msra.mxu0 %v224
    %903 = vmatprep.subr.bf16.mxu0 0
    %904 = vmatpush1.bf16.msra.mxu0 %v223
    %905 = vmatprep.subr.bf16.mxu0 0
    %906 = vmatpush1.bf16.msra.mxu0 %v222
    %907 = vmatprep.subr.bf16.mxu0 0
    %908 = vmatpush1.bf16.msra.mxu0 %v221
    %909 = vmatprep.subr.bf16.mxu0 0
    %910 = vmatpush2.bf16.msra.mxu0 0
    %911 = vmatprep.subr.bf16.mxu0 0
    %912 = vmatpush2.bf16.msra.mxu0 0
    %913 = vmatprep.subr.bf16.mxu0 0
    %914 = vmatpush2.bf16.msra.mxu0 0
    %915 = vmatprep.subr.bf16.mxu0 0
    %916 = vmatpush2.bf16.msra.mxu0 0
    %917 = vmatprep.subr.bf16.mxu0 0
    %918 = vmatpush2.bf16.msra.mxu0 0
    %919 = vmatprep.subr.bf16.mxu0 0
    %920 = vmatpush2.bf16.msra.mxu0 0
    %921 = vmatprep.subr.bf16.mxu0 0
    %922 = vmatpush2.bf16.msra.mxu0 0
    %923 = vmatprep.subr.bf16.mxu0 0
    %924 = vmatpush2.bf16.msra.mxu0 0
    %925 = vmatprep.mubr.bf16.mxu0 0
    %926 = vmatmul.mubr.bf16.gmra.mxu0 %v892
    %v927 = vpop.f32.mrf.mxu0
    %v928 = vadd.f32 %v187, %v927
    %v929 = vpop.f32.mrf.mxu0
    %v930 = vpop.f32.mrf.mxu0
    %v931 = vpop.f32.mrf.mxu0
    %932 = vdwg.mxu0
    %v935 = vunpack.c.l.s4 1966171168
    %v936 = vunpack.c.0.s8 %v935
    %v937 = vlaneseq
    %v938 = vshrl.u32 %v937, 7
    %v939 = vsub.s32 %v936, %v938
    %v940 = vrot.slane %v928, %v939
    %v941 = vcombine.high %v940, %v940
    %v943 = vunpack.c.l.s4 1966171168
    %v944 = vunpack.c.0.s8 %v943
    %v945 = vlaneseq
    %v946 = vshrl.u32 %v945, 7
    %v947 = vsub.s32 %v944, %v946
    %v948 = vrot.slane %v940, %v947
    %v950 = vunpack.c.l.s4 1966171168
    %v951 = vunpack.c.0.s8 %v950
    %v952 = vlaneseq
    %v953 = vshrl.u32 %v952, 7
    %v954 = vsub.s32 %v951, %v953
    %v955 = vrot.slane %v941, %v954
    %958 = vst [vmem:[#allocation8 + $0x4] sm:$0x1] %v948
    %959 = vst [vmem:[#allocation8 + $0xc] sm:$0x1] %v955
    %v960 = vld [vmem:[#allocation2] sm:$0x1]
    %v961 = vld [vmem:[#allocation2 + $0x1] sm:$0x1]
    %v962 = vld [vmem:[#allocation5] sm:$0xff]
    %v963 = vld [vmem:[#allocation5 + $0x8] sm:$0xff]
    %v966 = vcombine.low %v960, %v961
    %v968 = vunpack.c.l.s4 1966171168
    %v969 = vunpack.c.0.s8 %v968
    %v970 = vlaneseq
    %v971 = vshrl.u32 %v970, 7
    %v972 = vsub.s32 %v969, %v971
    %v973 = vrot.slane %v966, %v972
    %v975 = vunpack.c.l.s4 1966171168
    %v976 = vunpack.c.0.s8 %v975
    %v977 = vlaneseq
    %v978 = vshrl.u32 %v977, 7
    %v979 = vsub.s32 %v976, %v978
    %v980 = vrot.slane %v973, %v979
    %981 = vrot.lane.b32.xlu0 %v980, 48
    %v982 = vpop.permute.xlu0 %981
    %v983 = vsel %vm108, %v982, 0
    %985 = vmatprep.subr.mxu0 0.0
    %986 = vmatpush1.msra.mxu0 0.0
    %987 = vmatprep.subr.mxu0 0.0
    %988 = vmatpush1.msra.mxu0 0.0
    %989 = vmatprep.subr.mxu0 0.0
    %990 = vmatpush1.msra.mxu0 0.0
    %991 = vmatprep.subr.mxu0 0.0
    %992 = vmatpush1.msra.mxu0 0.0
    %993 = vmatprep.subr.mxu0 0.0
    %994 = vmatpush1.msra.mxu0 0.0
    %995 = vmatprep.subr.mxu0 0.0
    %996 = vmatpush1.msra.mxu0 0.0
    %997 = vmatprep.subr.mxu0 0.0
    %998 = vmatpush1.msra.mxu0 0.0
    %999 = vmatprep.subr.mxu0 0.0
    %1000 = vmatpush1.msra.mxu0 0.0
    %1001 = vmatprep.subr.mxu0 0.0
    %1002 = vmatpush1.msra.mxu0 0.0
    %1003 = vmatprep.subr.mxu0 0.0
    %1004 = vmatpush1.msra.mxu0 0.0
    %1005 = vmatprep.subr.mxu0 0.0
    %1006 = vmatpush1.msra.mxu0 0.0
    %1007 = vmatprep.subr.mxu0 0.0
    %1008 = vmatpush1.msra.mxu0 0.0
    %1009 = vmatprep.subr.mxu0 0.0
    %1010 = vmatpush1.msra.mxu0 0.0
    %1011 = vmatprep.subr.mxu0 0.0
    %1012 = vmatpush1.msra.mxu0 0.0
    %1013 = vmatprep.subr.mxu0 0.0
    %1014 = vmatpush1.msra.mxu0 %v963
    %1015 = vmatprep.subr.mxu0 0.0
    %1016 = vmatpush1.msra.mxu0 %v962
    %1017 = vmatprep.subr.mxu0 0.0
    %1018 = vmatpush2.msra.mxu0 0.0
    %1019 = vmatprep.subr.mxu0 0.0
    %1020 = vmatpush2.msra.mxu0 0.0
    %1021 = vmatprep.subr.mxu0 0.0
    %1022 = vmatpush2.msra.mxu0 0.0
    %1023 = vmatprep.subr.mxu0 0.0
    %1024 = vmatpush2.msra.mxu0 0.0
    %1025 = vmatprep.subr.mxu0 0.0
    %1026 = vmatpush2.msra.mxu0 0.0
    %1027 = vmatprep.subr.mxu0 0.0
    %1028 = vmatpush2.msra.mxu0 0.0
    %1029 = vmatprep.subr.mxu0 0.0
    %1030 = vmatpush2.msra.mxu0 0.0
    %1031 = vmatprep.subr.mxu0 0.0
    %1032 = vmatpush2.msra.mxu0 0.0
    %1033 = vmatprep.subr.mxu0 0.0
    %1034 = vmatpush2.msra.mxu0 0.0
    %1035 = vmatprep.subr.mxu0 0.0
    %1036 = vmatpush2.msra.mxu0 0.0
    %1037 = vmatprep.subr.mxu0 0.0
    %1038 = vmatpush2.msra.mxu0 0.0
    %1039 = vmatprep.subr.mxu0 0.0
    %1040 = vmatpush2.msra.mxu0 0.0
    %1041 = vmatprep.subr.mxu0 0.0
    %1042 = vmatpush2.msra.mxu0 0.0
    %1043 = vmatprep.subr.mxu0 0.0
    %1044 = vmatpush2.msra.mxu0 0.0
    %1045 = vmatprep.subr.mxu0 0.0
    %1046 = vmatpush2.msra.mxu0 0.0
    %1047 = vmatprep.subr.mxu0 0.0
    %1048 = vmatpush2.msra.mxu0 0.0
    %1049 = vmatprep.mubr.f32.mxu0 0.0
    %1050 = vmatmul.mubr.f32.gmra.mxu0 %v983
    %v1051 = vpop.f32.mrf.mxu0
    %v1052 = vadd.f32 %v89, %v1051
    %v1053 = vpop.f32.mrf.mxu0
    %1054 = vdwg.mxu0
    %v1055 = vmax.f32 %v1052, 0.0
    %v1056 = vpack.c.bf16 %v1055, %v1055
    %1057 = vmatprep.subr.bf16.mxu0 0
    %1058 = vmatpush1.bf16.msra.mxu0 %v228
    %1059 = vmatprep.subr.bf16.mxu0 0
    %1060 = vmatpush1.bf16.msra.mxu0 %v227
    %1061 = vmatprep.subr.bf16.mxu0 0
    %1062 = vmatpush1.bf16.msra.mxu0 %v226
    %1063 = vmatprep.subr.bf16.mxu0 0
    %1064 = vmatpush1.bf16.msra.mxu0 %v225
    %1065 = vmatprep.subr.bf16.mxu0 0
    %1066 = vmatpush1.bf16.msra.mxu0 %v224
    %1067 = vmatprep.subr.bf16.mxu0 0
    %1068 = vmatpush1.bf16.msra.mxu0 %v223
    %1069 = vmatprep.subr.bf16.mxu0 0
    %1070 = vmatpush1.bf16.msra.mxu0 %v222
    %1071 = vmatprep.subr.bf16.mxu0 0
    %1072 = vmatpush1.bf16.msra.mxu0 %v221
    %1073 = vmatprep.subr.bf16.mxu0 0
    %1074 = vmatpush2.bf16.msra.mxu0 0
    %1075 = vmatprep.subr.bf16.mxu0 0
    %1076 = vmatpush2.bf16.msra.mxu0 0
    %1077 = vmatprep.subr.bf16.mxu0 0
    %1078 = vmatpush2.bf16.msra.mxu0 0
    %1079 = vmatprep.subr.bf16.mxu0 0
    %1080 = vmatpush2.bf16.msra.mxu0 0
    %1081 = vmatprep.subr.bf16.mxu0 0
    %1082 = vmatpush2.bf16.msra.mxu0 0
    %1083 = vmatprep.subr.bf16.mxu0 0
    %1084 = vmatpush2.bf16.msra.mxu0 0
    %1085 = vmatprep.subr.bf16.mxu0 0
    %1086 = vmatpush2.bf16.msra.mxu0 0
    %1087 = vmatprep.subr.bf16.mxu0 0
    %1088 = vmatpush2.bf16.msra.mxu0 0
    %1089 = vmatprep.mubr.bf16.mxu0 0
    %1090 = vmatmul.mubr.bf16.gmra.mxu0 %v1056
    %v1091 = vpop.f32.mrf.mxu0
    %v1092 = vadd.f32 %v187, %v1091
    %v1093 = vpop.f32.mrf.mxu0
    %v1094 = vpop.f32.mrf.mxu0
    %v1095 = vpop.f32.mrf.mxu0
    %1096 = vdwg.mxu0
    %v1099 = vunpack.c.l.s4 1966171168
    %v1100 = vunpack.c.0.s8 %v1099
    %v1101 = vlaneseq
    %v1102 = vshrl.u32 %v1101, 7
    %v1103 = vsub.s32 %v1100, %v1102
    %v1104 = vrot.slane %v1092, %v1103
    %v1105 = vcombine.high %v1104, %v1104
    %v1107 = vunpack.c.l.s4 1966171168
    %v1108 = vunpack.c.0.s8 %v1107
    %v1109 = vlaneseq
    %v1110 = vshrl.u32 %v1109, 7
    %v1111 = vsub.s32 %v1108, %v1110
    %v1112 = vrot.slane %v1104, %v1111
    %v1114 = vunpack.c.l.s4 1966171168
    %v1115 = vunpack.c.0.s8 %v1114
    %v1116 = vlaneseq
    %v1117 = vshrl.u32 %v1116, 7
    %v1118 = vsub.s32 %v1115, %v1117
    %v1119 = vrot.slane %v1105, %v1118
    %1122 = vst [vmem:[#allocation8 + $0x5] sm:$0x1] %v1112
    %1123 = vst [vmem:[#allocation8 + $0xd] sm:$0x1] %v1119
    %v1124 = vld [vmem:[#allocation2] sm:$0x1]
    %v1125 = vld [vmem:[#allocation2 + $0x1] sm:$0x1]
    %v1126 = vld [vmem:[#allocation5] sm:$0xff]
    %v1127 = vld [vmem:[#allocation5 + $0x8] sm:$0xff]
    %v1130 = vcombine.low %v1124, %v1125
    %v1132 = vunpack.c.l.s4 1966171168
    %v1133 = vunpack.c.0.s8 %v1132
    %v1134 = vlaneseq
    %v1135 = vshrl.u32 %v1134, 7
    %v1136 = vsub.s32 %v1133, %v1135
    %v1137 = vrot.slane %v1130, %v1136
    %v1139 = vunpack.c.l.s4 1966171168
    %v1140 = vunpack.c.0.s8 %v1139
    %v1141 = vlaneseq
    %v1142 = vshrl.u32 %v1141, 7
    %v1143 = vsub.s32 %v1140, %v1142
    %v1144 = vrot.slane %v1137, %v1143
    %1145 = vrot.lane.b32.xlu0 %v1144, 32
    %v1146 = vpop.permute.xlu0 %1145
    %v1147 = vsel %vm108, %v1146, 0
    %1149 = vmatprep.subr.mxu0 0.0
    %1150 = vmatpush1.msra.mxu0 0.0
    %1151 = vmatprep.subr.mxu0 0.0
    %1152 = vmatpush1.msra.mxu0 0.0
    %1153 = vmatprep.subr.mxu0 0.0
    %1154 = vmatpush1.msra.mxu0 0.0
    %1155 = vmatprep.subr.mxu0 0.0
    %1156 = vmatpush1.msra.mxu0 0.0
    %1157 = vmatprep.subr.mxu0 0.0
    %1158 = vmatpush1.msra.mxu0 0.0
    %1159 = vmatprep.subr.mxu0 0.0
    %1160 = vmatpush1.msra.mxu0 0.0
    %1161 = vmatprep.subr.mxu0 0.0
    %1162 = vmatpush1.msra.mxu0 0.0
    %1163 = vmatprep.subr.mxu0 0.0
    %1164 = vmatpush1.msra.mxu0 0.0
    %1165 = vmatprep.subr.mxu0 0.0
    %1166 = vmatpush1.msra.mxu0 0.0
    %1167 = vmatprep.subr.mxu0 0.0
    %1168 = vmatpush1.msra.mxu0 0.0
    %1169 = vmatprep.subr.mxu0 0.0
    %1170 = vmatpush1.msra.mxu0 0.0
    %1171 = vmatprep.subr.mxu0 0.0
    %1172 = vmatpush1.msra.mxu0 0.0
    %1173 = vmatprep.subr.mxu0 0.0
    %1174 = vmatpush1.msra.mxu0 0.0
    %1175 = vmatprep.subr.mxu0 0.0
    %1176 = vmatpush1.msra.mxu0 0.0
    %1177 = vmatprep.subr.mxu0 0.0
    %1178 = vmatpush1.msra.mxu0 %v1127
    %1179 = vmatprep.subr.mxu0 0.0
    %1180 = vmatpush1.msra.mxu0 %v1126
    %1181 = vmatprep.subr.mxu0 0.0
    %1182 = vmatpush2.msra.mxu0 0.0
    %1183 = vmatprep.subr.mxu0 0.0
    %1184 = vmatpush2.msra.mxu0 0.0
    %1185 = vmatprep.subr.mxu0 0.0
    %1186 = vmatpush2.msra.mxu0 0.0
    %1187 = vmatprep.subr.mxu0 0.0
    %1188 = vmatpush2.msra.mxu0 0.0
    %1189 = vmatprep.subr.mxu0 0.0
    %1190 = vmatpush2.msra.mxu0 0.0
    %1191 = vmatprep.subr.mxu0 0.0
    %1192 = vmatpush2.msra.mxu0 0.0
    %1193 = vmatprep.subr.mxu0 0.0
    %1194 = vmatpush2.msra.mxu0 0.0
    %1195 = vmatprep.subr.mxu0 0.0
    %1196 = vmatpush2.msra.mxu0 0.0
    %1197 = vmatprep.subr.mxu0 0.0
    %1198 = vmatpush2.msra.mxu0 0.0
    %1199 = vmatprep.subr.mxu0 0.0
    %1200 = vmatpush2.msra.mxu0 0.0
    %1201 = vmatprep.subr.mxu0 0.0
    %1202 = vmatpush2.msra.mxu0 0.0
    %1203 = vmatprep.subr.mxu0 0.0
    %1204 = vmatpush2.msra.mxu0 0.0
    %1205 = vmatprep.subr.mxu0 0.0
    %1206 = vmatpush2.msra.mxu0 0.0
    %1207 = vmatprep.subr.mxu0 0.0
    %1208 = vmatpush2.msra.mxu0 0.0
    %1209 = vmatprep.subr.mxu0 0.0
    %1210 = vmatpush2.msra.mxu0 0.0
    %1211 = vmatprep.subr.mxu0 0.0
    %1212 = vmatpush2.msra.mxu0 0.0
    %1213 = vmatprep.mubr.f32.mxu0 0.0
    %1214 = vmatmul.mubr.f32.gmra.mxu0 %v1147
    %v1215 = vpop.f32.mrf.mxu0
    %v1216 = vadd.f32 %v89, %v1215
    %v1217 = vpop.f32.mrf.mxu0
    %1218 = vdwg.mxu0
    %v1219 = vmax.f32 %v1216, 0.0
    %v1220 = vpack.c.bf16 %v1219, %v1219
    %1221 = vmatprep.subr.bf16.mxu0 0
    %1222 = vmatpush1.bf16.msra.mxu0 %v228
    %1223 = vmatprep.subr.bf16.mxu0 0
    %1224 = vmatpush1.bf16.msra.mxu0 %v227
    %1225 = vmatprep.subr.bf16.mxu0 0
    %1226 = vmatpush1.bf16.msra.mxu0 %v226
    %1227 = vmatprep.subr.bf16.mxu0 0
    %1228 = vmatpush1.bf16.msra.mxu0 %v225
    %1229 = vmatprep.subr.bf16.mxu0 0
    %1230 = vmatpush1.bf16.msra.mxu0 %v224
    %1231 = vmatprep.subr.bf16.mxu0 0
    %1232 = vmatpush1.bf16.msra.mxu0 %v223
    %1233 = vmatprep.subr.bf16.mxu0 0
    %1234 = vmatpush1.bf16.msra.mxu0 %v222
    %1235 = vmatprep.subr.bf16.mxu0 0
    %1236 = vmatpush1.bf16.msra.mxu0 %v221
    %1237 = vmatprep.subr.bf16.mxu0 0
    %1238 = vmatpush2.bf16.msra.mxu0 0
    %1239 = vmatprep.subr.bf16.mxu0 0
    %1240 = vmatpush2.bf16.msra.mxu0 0
    %1241 = vmatprep.subr.bf16.mxu0 0
    %1242 = vmatpush2.bf16.msra.mxu0 0
    %1243 = vmatprep.subr.bf16.mxu0 0
    %1244 = vmatpush2.bf16.msra.mxu0 0
    %1245 = vmatprep.subr.bf16.mxu0 0
    %1246 = vmatpush2.bf16.msra.mxu0 0
    %1247 = vmatprep.subr.bf16.mxu0 0
    %1248 = vmatpush2.bf16.msra.mxu0 0
    %1249 = vmatprep.subr.bf16.mxu0 0
    %1250 = vmatpush2.bf16.msra.mxu0 0
    %1251 = vmatprep.subr.bf16.mxu0 0
    %1252 = vmatpush2.bf16.msra.mxu0 0
    %1253 = vmatprep.mubr.bf16.mxu0 0
    %1254 = vmatmul.mubr.bf16.gmra.mxu0 %v1220
    %v1255 = vpop.f32.mrf.mxu0
    %v1256 = vadd.f32 %v187, %v1255
    %v1257 = vpop.f32.mrf.mxu0
    %v1258 = vpop.f32.mrf.mxu0
    %v1259 = vpop.f32.mrf.mxu0
    %1260 = vdwg.mxu0
    %v1263 = vunpack.c.l.s4 1966171168
    %v1264 = vunpack.c.0.s8 %v1263
    %v1265 = vlaneseq
    %v1266 = vshrl.u32 %v1265, 7
    %v1267 = vsub.s32 %v1264, %v1266
    %v1268 = vrot.slane %v1256, %v1267
    %v1269 = vcombine.high %v1268, %v1268
    %v1271 = vunpack.c.l.s4 1966171168
    %v1272 = vunpack.c.0.s8 %v1271
    %v1273 = vlaneseq
    %v1274 = vshrl.u32 %v1273, 7
    %v1275 = vsub.s32 %v1272, %v1274
    %v1276 = vrot.slane %v1268, %v1275
    %v1278 = vunpack.c.l.s4 1966171168
    %v1279 = vunpack.c.0.s8 %v1278
    %v1280 = vlaneseq
    %v1281 = vshrl.u32 %v1280, 7
    %v1282 = vsub.s32 %v1279, %v1281
    %v1283 = vrot.slane %v1269, %v1282
    %1286 = vst [vmem:[#allocation8 + $0x6] sm:$0x1] %v1276
    %1287 = vst [vmem:[#allocation8 + $0xe] sm:$0x1] %v1283
    %v1288 = vld [vmem:[#allocation2] sm:$0x1]
    %v1289 = vld [vmem:[#allocation2 + $0x1] sm:$0x1]
    %v1290 = vld [vmem:[#allocation5] sm:$0xff]
    %v1291 = vld [vmem:[#allocation5 + $0x8] sm:$0xff]
    %v1294 = vcombine.low %v1288, %v1289
    %v1296 = vunpack.c.l.s4 1966171168
    %v1297 = vunpack.c.0.s8 %v1296
    %v1298 = vlaneseq
    %v1299 = vshrl.u32 %v1298, 7
    %v1300 = vsub.s32 %v1297, %v1299
    %v1301 = vrot.slane %v1294, %v1300
    %v1303 = vunpack.c.l.s4 1966171168
    %v1304 = vunpack.c.0.s8 %v1303
    %v1305 = vlaneseq
    %v1306 = vshrl.u32 %v1305, 7
    %v1307 = vsub.s32 %v1304, %v1306
    %v1308 = vrot.slane %v1301, %v1307
    %1309 = vrot.lane.b32.xlu0 %v1308, 16
    %v1310 = vpop.permute.xlu0 %1309
    %v1311 = vsel %vm108, %v1310, 0
    %1313 = vmatprep.subr.mxu0 0.0
    %1314 = vmatpush1.msra.mxu0 0.0
    %1315 = vmatprep.subr.mxu0 0.0
    %1316 = vmatpush1.msra.mxu0 0.0
    %1317 = vmatprep.subr.mxu0 0.0
    %1318 = vmatpush1.msra.mxu0 0.0
    %1319 = vmatprep.subr.mxu0 0.0
    %1320 = vmatpush1.msra.mxu0 0.0
    %1321 = vmatprep.subr.mxu0 0.0
    %1322 = vmatpush1.msra.mxu0 0.0
    %1323 = vmatprep.subr.mxu0 0.0
    %1324 = vmatpush1.msra.mxu0 0.0
    %1325 = vmatprep.subr.mxu0 0.0
    %1326 = vmatpush1.msra.mxu0 0.0
    %1327 = vmatprep.subr.mxu0 0.0
    %1328 = vmatpush1.msra.mxu0 0.0
    %1329 = vmatprep.subr.mxu0 0.0
    %1330 = vmatpush1.msra.mxu0 0.0
    %1331 = vmatprep.subr.mxu0 0.0
    %1332 = vmatpush1.msra.mxu0 0.0
    %1333 = vmatprep.subr.mxu0 0.0
    %1334 = vmatpush1.msra.mxu0 0.0
    %1335 = vmatprep.subr.mxu0 0.0
    %1336 = vmatpush1.msra.mxu0 0.0
    %1337 = vmatprep.subr.mxu0 0.0
    %1338 = vmatpush1.msra.mxu0 0.0
    %1339 = vmatprep.subr.mxu0 0.0
    %1340 = vmatpush1.msra.mxu0 0.0
    %1341 = vmatprep.subr.mxu0 0.0
    %1342 = vmatpush1.msra.mxu0 %v1291
    %1343 = vmatprep.subr.mxu0 0.0
    %1344 = vmatpush1.msra.mxu0 %v1290
    %1345 = vmatprep.subr.mxu0 0.0
    %1346 = vmatpush2.msra.mxu0 0.0
    %1347 = vmatprep.subr.mxu0 0.0
    %1348 = vmatpush2.msra.mxu0 0.0
    %1349 = vmatprep.subr.mxu0 0.0
    %1350 = vmatpush2.msra.mxu0 0.0
    %1351 = vmatprep.subr.mxu0 0.0
    %1352 = vmatpush2.msra.mxu0 0.0
    %1353 = vmatprep.subr.mxu0 0.0
    %1354 = vmatpush2.msra.mxu0 0.0
    %1355 = vmatprep.subr.mxu0 0.0
    %1356 = vmatpush2.msra.mxu0 0.0
    %1357 = vmatprep.subr.mxu0 0.0
    %1358 = vmatpush2.msra.mxu0 0.0
    %1359 = vmatprep.subr.mxu0 0.0
    %1360 = vmatpush2.msra.mxu0 0.0
    %1361 = vmatprep.subr.mxu0 0.0
    %1362 = vmatpush2.msra.mxu0 0.0
    %1363 = vmatprep.subr.mxu0 0.0
    %1364 = vmatpush2.msra.mxu0 0.0
    %1365 = vmatprep.subr.mxu0 0.0
    %1366 = vmatpush2.msra.mxu0 0.0
    %1367 = vmatprep.subr.mxu0 0.0
    %1368 = vmatpush2.msra.mxu0 0.0
    %1369 = vmatprep.subr.mxu0 0.0
    %1370 = vmatpush2.msra.mxu0 0.0
    %1371 = vmatprep.subr.mxu0 0.0
    %1372 = vmatpush2.msra.mxu0 0.0
    %1373 = vmatprep.subr.mxu0 0.0
    %1374 = vmatpush2.msra.mxu0 0.0
    %1375 = vmatprep.subr.mxu0 0.0
    %1376 = vmatpush2.msra.mxu0 0.0
    %1377 = vmatprep.mubr.f32.mxu0 0.0
    %1378 = vmatmul.mubr.f32.gmra.mxu0 %v1311
    %v1379 = vpop.f32.mrf.mxu0
    %v1380 = vadd.f32 %v89, %v1379
    %v1381 = vpop.f32.mrf.mxu0
    %1382 = vdwg.mxu0
    %v1383 = vmax.f32 %v1380, 0.0
    %v1384 = vpack.c.bf16 %v1383, %v1383
    %1385 = vmatprep.subr.bf16.mxu0 0
    %1386 = vmatpush1.bf16.msra.mxu0 %v228
    %1387 = vmatprep.subr.bf16.mxu0 0
    %1388 = vmatpush1.bf16.msra.mxu0 %v227
    %1389 = vmatprep.subr.bf16.mxu0 0
    %1390 = vmatpush1.bf16.msra.mxu0 %v226
    %1391 = vmatprep.subr.bf16.mxu0 0
    %1392 = vmatpush1.bf16.msra.mxu0 %v225
    %1393 = vmatprep.subr.bf16.mxu0 0
    %1394 = vmatpush1.bf16.msra.mxu0 %v224
    %1395 = vmatprep.subr.bf16.mxu0 0
    %1396 = vmatpush1.bf16.msra.mxu0 %v223
    %1397 = vmatprep.subr.bf16.mxu0 0
    %1398 = vmatpush1.bf16.msra.mxu0 %v222
    %1399 = vmatprep.subr.bf16.mxu0 0
    %1400 = vmatpush1.bf16.msra.mxu0 %v221
    %1401 = vmatprep.subr.bf16.mxu0 0
    %1402 = vmatpush2.bf16.msra.mxu0 0
    %1403 = vmatprep.subr.bf16.mxu0 0
    %1404 = vmatpush2.bf16.msra.mxu0 0
    %1405 = vmatprep.subr.bf16.mxu0 0
    %1406 = vmatpush2.bf16.msra.mxu0 0
    %1407 = vmatprep.subr.bf16.mxu0 0
    %1408 = vmatpush2.bf16.msra.mxu0 0
    %1409 = vmatprep.subr.bf16.mxu0 0
    %1410 = vmatpush2.bf16.msra.mxu0 0
    %1411 = vmatprep.subr.bf16.mxu0 0
    %1412 = vmatpush2.bf16.msra.mxu0 0
    %1413 = vmatprep.subr.bf16.mxu0 0
    %1414 = vmatpush2.bf16.msra.mxu0 0
    %1415 = vmatprep.subr.bf16.mxu0 0
    %1416 = vmatpush2.bf16.msra.mxu0 0
    %1417 = vmatprep.mubr.bf16.mxu0 0
    %1418 = vmatmul.mubr.bf16.gmra.mxu0 %v1384
    %v1419 = vpop.f32.mrf.mxu0
    %v1420 = vadd.f32 %v187, %v1419
    %v1421 = vpop.f32.mrf.mxu0
    %v1422 = vpop.f32.mrf.mxu0
    %v1423 = vpop.f32.mrf.mxu0
    %1424 = vdwg.mxu0
    %v1427 = vunpack.c.l.s4 1966171168
    %v1428 = vunpack.c.0.s8 %v1427
    %v1429 = vlaneseq
    %v1430 = vshrl.u32 %v1429, 7
    %v1431 = vsub.s32 %v1428, %v1430
    %v1432 = vrot.slane %v1420, %v1431
    %v1433 = vcombine.high %v1432, %v1432
    %v1435 = vunpack.c.l.s4 1966171168
    %v1436 = vunpack.c.0.s8 %v1435
    %v1437 = vlaneseq
    %v1438 = vshrl.u32 %v1437, 7
    %v1439 = vsub.s32 %v1436, %v1438
    %v1440 = vrot.slane %v1432, %v1439
    %v1442 = vunpack.c.l.s4 1966171168
    %v1443 = vunpack.c.0.s8 %v1442
    %v1444 = vlaneseq
    %v1445 = vshrl.u32 %v1444, 7
    %v1446 = vsub.s32 %v1443, %v1445
    %v1447 = vrot.slane %v1433, %v1446
    %1450 = vst [vmem:[#allocation8 + $0x7] sm:$0x1] %v1440
    %1451 = vst [vmem:[#allocation8 + $0xf] sm:$0x1] %v1447
    // Predicated region
    $region34: #{tpu_custom_call.1} parent=1 // pred_check
      _
    $region35: #{tpu_custom_call.1} parent=1 // pred_check_branch
      %1453 = sbr.rel (0) target = $region37
    $region36: #{tpu_custom_call.1} parent=1 // pred_region
      %s1455 = ssub.s32 256, 256
      %1456 = vsyncadd [#allocation4], %s1455
      %s1457 = sshll.u32 [#allocation8], 4
      %s1458 = int_to_ptr.vmem [resolvable:$true] %s1457
      %1463 = dma.vmem_to_hbm [thread:$0]  %s1458, 256, %s5, [#allocation4], 128, 128, 8
    $region37: #{tpu_custom_call.1} parent=1 // pred_fallthru
      _
    // Predicated region
    $region38: #{tpu_custom_call.1} parent=1 // pred_check
      _
    $region39: #{tpu_custom_call.1} parent=1 // pred_check_branch
      %1465 = sbr.rel (0) target = $region41
    $region40: #{tpu_custom_call.1} parent=1 // pred_region
      %1466 = dma.done [#allocation4], 256
    $region41: #{tpu_custom_call.1} parent=1 // pred_fallthru
      _
    %1467 = vsyncpa [#allocation3], 1
    %1468 = vsyncpa [#allocation6], 1
    %1469 = vsyncpa [#allocation4], 1

</llo_original>
